<compile_context>
chip_gen: v5e
topology: v5e:2x2
jax: 0.10.0
libtpu: 0.0.40
codegen_flags: <defaults>
</compile_context>

<pallas_src>
import math

import jax
import jax.numpy as jnp
from jax.experimental import pallas as pl
from jax.experimental.pallas import tpu as pltpu


def _round_up(x, m):
    return ((x + m - 1) // m) * m


def _gelu_exact(x):
    # PyTorch nn.GELU() default: exact erf-based GELU.
    return 0.5 * x * (1.0 + jax.lax.erf(x / math.sqrt(2.0)))


def dnn_kernel(x_ref, w1_ref, b1_ref, w2_ref, b2_ref, o_ref):
    # Fused linear -> GELU -> linear on one (TILE_M, Dp) activation tile.
    x = x_ref[...]                                            # (TILE_M, Dp)
    h = jnp.dot(x, w1_ref[...], preferred_element_type=jnp.float32)
    h = h + b1_ref[...]                                       # (1, Dp) broadcast
    h = _gelu_exact(h)                                        # f32 math
    y = jnp.dot(h.astype(w2_ref.dtype), w2_ref[...],
                preferred_element_type=jnp.float32)
    y = y + b2_ref[...]
    o_ref[...] = y.astype(o_ref.dtype)


def _vmem_estimate(tile_m, dp, act_bytes, w_bytes, out_bytes):
    # Everything double-buffered by BlockSpec; f32 intermediate tile on top.
    weights = 2 * 2 * dp * dp * w_bytes
    biases = 2 * 2 * dp * 4
    act = 2 * tile_m * dp * act_bytes + 2 * tile_m * dp * out_bytes
    interm = 2 * tile_m * dp * 4
    return weights + biases + act + interm


def dnn_forward(x, w1, b1, w2, b2, *, tile_m=256, compute_dtype=None):
    """x: [B, S, D]; w1/w2 pre-transposed to (in, out). Returns ([B, S, D], None)."""
    B, S, D = x.shape
    M = B * S
    out_dtype = x.dtype
    cdtype = compute_dtype if compute_dtype is not None else x.dtype

    # Lane-dense last dim (multiple of 128); 8-aligned M tiles.
    Dp = _round_up(max(D, 128), 128)
    tile_m = min(tile_m, _round_up(M, 8))

    act_b = jnp.dtype(cdtype).itemsize
    out_b = jnp.dtype(out_dtype).itemsize
    VMEM_BUDGET = 40 * 1024 * 1024   # conservative: fits v7x 64 MiB with headroom
    while tile_m > 8 and _vmem_estimate(tile_m, Dp, act_b, act_b, out_b) > VMEM_BUDGET:
        tile_m = max(8, tile_m // 2)

    Mp = _round_up(M, tile_m)

    # Zero-pad M and D.  Padded D columns stay exactly zero through both linears
    # (zero weight rows/cols, zero bias, GELU(0)=0), so slicing afterwards is exact.
    x2 = x.reshape(M, D).astype(cdtype)
    if Mp != M or Dp != D:
        x2 = jnp.pad(x2, ((0, Mp - M), (0, Dp - D)))

    def pad_w(w):
        w = w.astype(cdtype)
        if Dp != D:
            w = jnp.pad(w, ((0, Dp - D), (0, Dp - D)))
        return w

    def pad_b(b):
        b = b.astype(jnp.float32)
        if Dp != D:
            b = jnp.pad(b, (0, Dp - D))
        return b.reshape(1, Dp)

    w1p, w2p = pad_w(w1), pad_w(w2)
    b1p, b2p = pad_b(b1), pad_b(b2)

    grid = (Mp // tile_m,)

    cp_kwargs = {}
    est = _vmem_estimate(tile_m, Dp, act_b, act_b, out_b)
    if est > 16 * 1024 * 1024:  # above the tightest (v5e) scoped default
        cp_kwargs["vmem_limit_bytes"] = int(
            min(_round_up(int(est * 1.25), 1 << 20), 56 * 1024 * 1024))

    out = pl.pallas_call(
        dnn_kernel,
        out_shape=jax.ShapeDtypeStruct((Mp, Dp), out_dtype),
        grid_spec=pltpu.PrefetchScalarGridSpec(
            num_scalar_prefetch=0,
            grid=grid,
            in_specs=[
                pl.BlockSpec((tile_m, Dp), lambda i: (i, 0)),   # activation tile
                pl.BlockSpec((Dp, Dp), lambda i: (0, 0)),       # w1 resident
                pl.BlockSpec((1, Dp), lambda i: (0, 0)),        # b1 resident
                pl.BlockSpec((Dp, Dp), lambda i: (0, 0)),       # w2 resident
                pl.BlockSpec((1, Dp), lambda i: (0, 0)),        # b2 resident
            ],
            out_specs=pl.BlockSpec((tile_m, Dp), lambda i: (i, 0)),
        ),
        compiler_params=pltpu.CompilerParams(
            dimension_semantics=("parallel",),
            **cp_kwargs,
        ),
    )(x2, w1p, b1p, w2p, b2p)

    out = out[:M, :D].reshape(B, S, D)
    return out, None


def _reference(x, w1, b1, w2, b2):
    h = x @ w1 + b1
    h = _gelu_exact(h)
    return h @ w2 + b2


if __name__ == "__main__":
    key = jax.random.PRNGKey(0)
    # Small shapes consistent with the module; S chosen so M > TILE_M and the
    # tiled/pipelined grid path (grid > 1) is actually exercised.
    B, S, D = 2, 256, 32  # batch, seq, d_model

    k_x, k_w1, k_b1, k_w2, k_b2 = jax.random.split(key, 5)
    x = jax.random.normal(k_x, (B, S, D), dtype=jnp.float32)

    # Deterministic init mimicking nn.Linear (uniform in +-1/sqrt(fan_in)),
    # stored pre-transposed as (in, out) so kernel does x @ W.
    bound = 1.0 / math.sqrt(D)
    w1 = jax.random.uniform(k_w1, (D, D), minval=-bound, maxval=bound, dtype=jnp.float32)
    b1 = jax.random.uniform(k_b1, (D,), minval=-bound, maxval=bound, dtype=jnp.float32)
    w2 = jax.random.uniform(k_w2, (D, D), minval=-bound, maxval=bound, dtype=jnp.float32)
    b2 = jax.random.uniform(k_b2, (D,), minval=-bound, maxval=bound, dtype=jnp.float32)

    out, attn = dnn_forward(x, w1, b1, w2, b2)
    out = jax.block_until_ready(out)

    ref = _reference(x, w1, b1, w2, b2)
    assert attn is None
    assert out.shape == (B, S, D)
    assert jnp.allclose(out, ref, atol=1e-5, rtol=1e-5), "mismatch vs reference"

    print("KERNEL_OK")
</pallas_src>

<mosaic_0001>
module attributes {stable_mosaic.version = 11 : i64} {
  func.func @dnn_kernel(%arg0: i32, %arg1: memref<256x128xf32, #tpu.memory_space<vmem>>, %arg2: memref<128x128xf32, #tpu.memory_space<vmem>>, %arg3: memref<1x128xf32, #tpu.memory_space<vmem>>, %arg4: memref<128x128xf32, #tpu.memory_space<vmem>>, %arg5: memref<1x128xf32, #tpu.memory_space<vmem>>, %arg6: memref<256x128xf32, #tpu.memory_space<vmem>>) attributes {dimension_semantics = [#tpu.dimension_semantics<parallel>], iteration_bounds = array<i64: 2>, scalar_prefetch = 0 : i64, scratch_operands = 0 : i64, tpu.core_type = #tpu.core_type<tc>, window_params = [{transform_indices = @transform_0, window_bounds = array<i64: 256, 128>}, {pipeline_mode = #tpu.pipeline_mode<synchronous>, transform_indices = @transform_1, window_bounds = array<i64: 128, 128>}, {pipeline_mode = #tpu.pipeline_mode<synchronous>, transform_indices = @transform_2, window_bounds = array<i64: 1, 128>}, {pipeline_mode = #tpu.pipeline_mode<synchronous>, transform_indices = @transform_3, window_bounds = array<i64: 128, 128>}, {pipeline_mode = #tpu.pipeline_mode<synchronous>, transform_indices = @transform_4, window_bounds = array<i64: 1, 128>}, {transform_indices = @transform_5, window_bounds = array<i64: 256, 128>}]} {
    %c0 = arith.constant 0 : index
    %c0_0 = arith.constant 0 : index
    %0 = vector.load %arg1[%c0, %c0_0] : memref<256x128xf32, #tpu.memory_space<vmem>>, vector<256x128xf32>
    %c0_1 = arith.constant 0 : index
    %c0_2 = arith.constant 0 : index
    %1 = vector.load %arg2[%c0_1, %c0_2] : memref<128x128xf32, #tpu.memory_space<vmem>>, vector<128x128xf32>
    %cst = arith.constant dense<0.000000e+00> : vector<256x128xf32>
    %2 = tpu.matmul %0, %1, %cst {dimension_numbers = #tpu.dot_dimension_numbers<[1], [0], [0], [1], [0, 0, 1, 1], [], []>} : vector<256x128xf32>, vector<128x128xf32>, vector<256x128xf32> -> vector<256x128xf32>
    %c0_3 = arith.constant 0 : index
    %c0_4 = arith.constant 0 : index
    %3 = vector.load %arg3[%c0_3, %c0_4] : memref<1x128xf32, #tpu.memory_space<vmem>>, vector<1x128xf32>
    %4 = vector.broadcast %3 : vector<1x128xf32> to vector<256x128xf32>
    %5 = arith.addf %2, %4 : vector<256x128xf32>
    %cst_5 = arith.constant 5.000000e-01 : f32
    %6 = vector.broadcast %cst_5 : f32 to vector<256x128xf32>
    %7 = arith.mulf %6, %5 : vector<256x128xf32>
    %cst_6 = arith.constant 1.41421354 : f32
    %8 = vector.broadcast %cst_6 : f32 to vector<256x128xf32>
    %9 = arith.divf %5, %8 : vector<256x128xf32>
    %10 = math.erf %9 : vector<256x128xf32>
    %cst_7 = arith.constant 1.000000e+00 : f32
    %11 = vector.broadcast %cst_7 : f32 to vector<256x128xf32>
    %12 = arith.addf %11, %10 : vector<256x128xf32>
    %13 = arith.mulf %7, %12 : vector<256x128xf32>
    %c0_8 = arith.constant 0 : index
    %c0_9 = arith.constant 0 : index
    %14 = vector.load %arg4[%c0_8, %c0_9] : memref<128x128xf32, #tpu.memory_space<vmem>>, vector<128x128xf32>
    %cst_10 = arith.constant dense<0.000000e+00> : vector<256x128xf32>
    %15 = tpu.matmul %13, %14, %cst_10 {dimension_numbers = #tpu.dot_dimension_numbers<[1], [0], [0], [1], [0, 0, 1, 1], [], []>} : vector<256x128xf32>, vector<128x128xf32>, vector<256x128xf32> -> vector<256x128xf32>
    %c0_11 = arith.constant 0 : index
    %c0_12 = arith.constant 0 : index
    %16 = vector.load %arg5[%c0_11, %c0_12] : memref<1x128xf32, #tpu.memory_space<vmem>>, vector<1x128xf32>
    %17 = vector.broadcast %16 : vector<1x128xf32> to vector<256x128xf32>
    %18 = arith.addf %15, %17 : vector<256x128xf32>
    %c0_13 = arith.constant 0 : index
    %c0_14 = arith.constant 0 : index
    %19 = vector.load %arg6[%c0_13, %c0_14] : memref<256x128xf32, #tpu.memory_space<vmem>>, vector<256x128xf32>
    tpu.vector_store %arg6[%c0_13, %c0_14], %18 {strides = array<i32>} : memref<256x128xf32, #tpu.memory_space<vmem>>, vector<256x128xf32>,
    return
  }
  func.func @transform_0(%arg0: i32) -> (i32, i32) {
    %c0_i32 = arith.constant 0 : i32
    %c0_i32_0 = arith.constant 0 : i32
    return %arg0, %c0_i32 : i32, i32
  }
  func.func @transform_1(%arg0: i32) -> (i32, i32) {
    %c0_i32 = arith.constant 0 : i32
    %c0_i32_0 = arith.constant 0 : i32
    %c0_i32_1 = arith.constant 0 : i32
    return %c0_i32, %c0_i32_0 : i32, i32
  }
  func.func @transform_2(%arg0: i32) -> (i32, i32) {
    %c0_i32 = arith.constant 0 : i32
    %c0_i32_0 = arith.constant 0 : i32
    %c0_i32_1 = arith.constant 0 : i32
    return %c0_i32, %c0_i32_0 : i32, i32
  }
  func.func @transform_3(%arg0: i32) -> (i32, i32) {
    %c0_i32 = arith.constant 0 : i32
    %c0_i32_0 = arith.constant 0 : i32
    %c0_i32_1 = arith.constant 0 : i32
    return %c0_i32, %c0_i32_0 : i32, i32
  }
  func.func @transform_4(%arg0: i32) -> (i32, i32) {
    %c0_i32 = arith.constant 0 : i32
    %c0_i32_0 = arith.constant 0 : i32
    %c0_i32_1 = arith.constant 0 : i32
    return %c0_i32, %c0_i32_0 : i32, i32
  }
  func.func @transform_5(%arg0: i32) -> (i32, i32) {
    %c0_i32 = arith.constant 0 : i32
    %c0_i32_0 = arith.constant 0 : i32
    return %arg0, %c0_i32 : i32, i32
  }
}

</mosaic_0001>

<llo_original>
// kernel: tpu_custom_call.1
$region0: #{tpu_custom_call.1}
  #allocation0 [shape = 'u32[]', space=smem, size = 0x4, offset = 0x4, fixed_abs, tag = 'smem constant byte address 0x4 - core index']
  #allocation1 [shape = 'u32[72,128]{1,0:T(1,128)}', space=vmem, size = 0x9000, scoped, tag = 'internal scratch']
  %s0 = inlined_call_operand.hbm [shape: f32[512,128], index: 0, kind: input, shape index: {}]
  %s1 = inlined_call_operand.hbm [shape: f32[128,128], index: 1, kind: input, shape index: {}]
  %s2 = inlined_call_operand.vmem [shape: f32[1,128], index: 2, kind: input, shape index: {}]
  %s3 = inlined_call_operand.hbm [shape: f32[128,128], index: 3, kind: input, shape index: {}]
  %s4 = inlined_call_operand.vmem [shape: f32[1,128], index: 4, kind: input, shape index: {}]
  %s5 = inlined_call_operand.hbm [shape: f32[512,128], index: 5, kind: output, shape index: {}]
  %s6 = sld [smem:[#allocation0]]
  $region65: #{tpu_custom_call.1} parent=0
    _
  %s8 = ssub.s32 1, %s6
  %s9 = scalar_select 0, %s8, %s6
  $region1: #{tpu_custom_call.1} parent=0
    #allocation2 [shape = 'u8[262144]{0}', space=vmem, size = 0x40000, scoped, tag = 'input window, operand 0']
    #allocation3 [shape = 's32[2]{0}', space=sflag, size = 0x8, scoped, tag = 'scoped memory for tpu_custom_call.1']
    #allocation4 [shape = 's32[2]{0}', space=sflag, size = 0x8, scoped, tag = 'scoped memory for tpu_custom_call.1']
    #allocation5 [shape = 'u8[65536]{0}', space=vmem, size = 0x10000, scoped, tag = 'input window, operand 1, single buffered']
    #allocation6 [shape = 's32[1]{0}', space=sflag, size = 0x4, scoped, tag = 'scoped memory for tpu_custom_call.1']
    #allocation7 [shape = 'u8[65536]{0}', space=vmem, size = 0x10000, scoped, tag = 'input window, operand 3, single buffered']
    #allocation8 [shape = 'u8[262144]{0}', space=vmem, size = 0x40000, scoped, tag = 'output window, operand 0']
    %10 = vsyncpa [#allocation3], 0
    %s11 = scalar_lea.sflag [#allocation3], 1
    %12 = vsyncpa %s11, 0
    %13 = vsyncpa [#allocation6], 0
    %14 = vsyncpa [#allocation4], 0
    %s15 = scalar_lea.sflag [#allocation4], 1
    %16 = vsyncpa %s15, 0
    loop: start=0, step=1, limit=4
    $region2: #{tpu_custom_call.1} parent=1 // loop_pre_header
      _
    $region3: #{tpu_custom_call.1} parent=1 // loop_header
      %s18 = sphi 0, %s22
      %p19 = scmp.ge.s32.totalorder %s18, 4
      %s28 = sphi 0, %s30
      %s31 = sphi 0, %s28
      %s32 = sphi 0, %s31
      %s48 = sphi 0, %s32
      %s52 = sphi 0, %s52
      %s54 = sphi 0, %s52
      %s55 = sphi 0, %s54
      %s69 = sphi 0, %s55
      %s73 = sphi 0, %s73
      %s75 = sphi 0, %s73
      %s76 = sphi 0, %s75
      %s90 = sphi 0, %s76
      %s94 = sphi 0, %s94
      %s96 = sphi 0, %s94
      %s97 = sphi 0, %s96
      %s111 = sphi 0, %s97
      %s115 = sphi 0, %s115
      %s117 = sphi 0, %s115
      %s118 = sphi 0, %s117
      %s132 = sphi 0, %s118
      %s138 = sphi 0, %s140
      %s141 = sphi 0, %s138
      %s142 = sphi 0, %s141
      %s158 = sphi 0, %s142
    $region4: #{tpu_custom_call.1} parent=1 // loop_header_branch
      %21 = sbr.rel (%p19) target = $region8
    $region5: #{tpu_custom_call.1} parent=1 // loop_body
      %s23 = ssub.s32 %s18, 1
      %s24 = ssub.s32 %s18, 2
      %s25 = sadd.s32 %s18, 1
      %s26 = ssub.s32 %s18, %s25
      %p27 = scmp.eq.s32.totalorder %s26, 0
      %s29 = sadd.s32 %s28, 1
      %s30 = scalar_select %p27, %s28, %s29
      %p33 = pneg %p27
      %p34 = scmp.eq.s32.totalorder %s18, 1
      %p35 = por %p33, %p34
      %p36 = scmp.ne.s32.totalorder %s28, %s31
      %p37 = scmp.eq.s32.totalorder %s18, 0
      %p38 = por %p36, %p37
      %p39 = scmp.ne.s32.totalorder %s28, %s31
      %p40 = scmp.eq.s32.totalorder %s23, 1
      %p41 = por %p39, %p40
      %p42 = scmp.ne.s32.totalorder %s31, %s32
      %p43 = scmp.eq.s32.totalorder %s23, 0
      %p44 = por %p42, %p43
      %p45 = scmp.ne.s32.totalorder %s31, %s32
      %p46 = scmp.eq.s32.totalorder %s24, 1
      %p47 = por %p45, %p46
      %p49 = scmp.ne.s32.totalorder %s32, %s48
      %p50 = scmp.eq.s32.totalorder %s24, 0
      %p51 = por %p49, %p50
      %s53 = sadd.s32 %s52, 1
      %p56 = scmp.eq.s32.totalorder %s18, 1
      %p57 = scmp.ne.s32.totalorder %s52, %s54
      %p58 = scmp.eq.s32.totalorder %s18, 0
      %p59 = por %p57, %p58
      %p60 = scmp.ne.s32.totalorder %s52, %s54
      %p61 = scmp.eq.s32.totalorder %s23, 1
      %p62 = por %p60, %p61
      %p63 = scmp.ne.s32.totalorder %s54, %s55
      %p64 = scmp.eq.s32.totalorder %s23, 0
      %p65 = por %p63, %p64
      %p66 = scmp.ne.s32.totalorder %s54, %s55
      %p67 = scmp.eq.s32.totalorder %s24, 1
      %p68 = por %p66, %p67
      %p70 = scmp.ne.s32.totalorder %s55, %s69
      %p71 = scmp.eq.s32.totalorder %s24, 0
      %p72 = por %p70, %p71
      %s74 = sadd.s32 %s73, 1
      %p77 = scmp.eq.s32.totalorder %s18, 1
      %p78 = scmp.ne.s32.totalorder %s73, %s75
      %p79 = scmp.eq.s32.totalorder %s18, 0
      %p80 = por %p78, %p79
      %p81 = scmp.ne.s32.totalorder %s73, %s75
      %p82 = scmp.eq.s32.totalorder %s23, 1
      %p83 = por %p81, %p82
      %p84 = scmp.ne.s32.totalorder %s75, %s76
      %p85 = scmp.eq.s32.totalorder %s23, 0
      %p86 = por %p84, %p85
      %p87 = scmp.ne.s32.totalorder %s75, %s76
      %p88 = scmp.eq.s32.totalorder %s24, 1
      %p89 = por %p87, %p88
      %p91 = scmp.ne.s32.totalorder %s76, %s90
      %p92 = scmp.eq.s32.totalorder %s24, 0
      %p93 = por %p91, %p92
      %s95 = sadd.s32 %s94, 1
      %p98 = scmp.eq.s32.totalorder %s18, 1
      %p99 = scmp.ne.s32.totalorder %s94, %s96
      %p100 = scmp.eq.s32.totalorder %s18, 0
      %p101 = por %p99, %p100
      %p102 = scmp.ne.s32.totalorder %s94, %s96
      %p103 = scmp.eq.s32.totalorder %s23, 1
      %p104 = por %p102, %p103
      %p105 = scmp.ne.s32.totalorder %s96, %s97
      %p106 = scmp.eq.s32.totalorder %s23, 0
      %p107 = por %p105, %p106
      %p108 = scmp.ne.s32.totalorder %s96, %s97
      %p109 = scmp.eq.s32.totalorder %s24, 1
      %p110 = por %p108, %p109
      %p112 = scmp.ne.s32.totalorder %s97, %s111
      %p113 = scmp.eq.s32.totalorder %s24, 0
      %p114 = por %p112, %p113
      %s116 = sadd.s32 %s115, 1
      %p119 = scmp.eq.s32.totalorder %s18, 1
      %p120 = scmp.ne.s32.totalorder %s115, %s117
      %p121 = scmp.eq.s32.totalorder %s18, 0
      %p122 = por %p120, %p121
      %p123 = scmp.ne.s32.totalorder %s115, %s117
      %p124 = scmp.eq.s32.totalorder %s23, 1
      %p125 = por %p123, %p124
      %p126 = scmp.ne.s32.totalorder %s117, %s118
      %p127 = scmp.eq.s32.totalorder %s23, 0
      %p128 = por %p126, %p127
      %p129 = scmp.ne.s32.totalorder %s117, %s118
      %p130 = scmp.eq.s32.totalorder %s24, 1
      %p131 = por %p129, %p130
      %p133 = scmp.ne.s32.totalorder %s118, %s132
      %p134 = scmp.eq.s32.totalorder %s24, 0
      %p135 = por %p133, %p134
      %s136 = ssub.s32 %s18, %s25
      %p137 = scmp.eq.s32.totalorder %s136, 0
      %s139 = sadd.s32 %s138, 1
      %s140 = scalar_select %p137, %s138, %s139
      %p143 = pneg %p137
      %p144 = scmp.eq.s32.totalorder %s18, 1
      %p145 = por %p143, %p144
      %p146 = scmp.ne.s32.totalorder %s138, %s141
      %p147 = scmp.eq.s32.totalorder %s18, 0
      %p148 = por %p146, %p147
      %p149 = scmp.ne.s32.totalorder %s138, %s141
      %p150 = scmp.eq.s32.totalorder %s23, 1
      %p151 = por %p149, %p150
      %p152 = scmp.ne.s32.totalorder %s141, %s142
      %p153 = scmp.eq.s32.totalorder %s23, 0
      %p154 = por %p152, %p153
      %p155 = scmp.ne.s32.totalorder %s141, %s142
      %p156 = scmp.eq.s32.totalorder %s24, 1
      %p157 = por %p155, %p156
      %p159 = scmp.ne.s32.totalorder %s142, %s158
      %p160 = scmp.eq.s32.totalorder %s24, 0
      %p161 = por %p159, %p160
      %p162 = scmp.le.s32.totalorder 1, %s18
      %p163 = scmp.lt.s32.totalorder %s18, 3
      %p164 = pnand %p162, %p163
      %p165 = pneg %p164
      // Predicated region
      $region9: #{tpu_custom_call.1} parent=5 // pred_check
        _
      $region10: #{tpu_custom_call.1} parent=5 // pred_check_branch
        %167 = sbr.rel (%p164) target = $region12
      $region11: #{tpu_custom_call.1} parent=5 // pred_region
        %s168 = ssub.s32 %s18, 1
        // Predicated region
        $region13: #{tpu_custom_call.1} parent=11 // pred_check
          %p169 = pneg %p65
        $region14: #{tpu_custom_call.1} parent=11 // pred_check_branch
          %171 = sbr.rel (%p169) target = $region16
        $region15: #{tpu_custom_call.1} parent=11 // pred_region
          %173 = vsyncadd [#allocation6], 0
          %s174 = sshll.u32 %s1, 4
          %s175 = int_to_ptr.hbm [resolvable:$true] %s174
          %s176 = sshll.u32 [#allocation5], 4
          %s177 = int_to_ptr.vmem [resolvable:$true] %s176
          %182 = dma.hbm_to_vmem [thread:$0]  %s175, 2048, %s177, [#allocation6], 128, 128, 8
        $region16: #{tpu_custom_call.1} parent=11 // pred_fallthru
          _
        // Predicated region
        $region17: #{tpu_custom_call.1} parent=11 // pred_check
          %p183 = pneg %p86
        $region18: #{tpu_custom_call.1} parent=11 // pred_check_branch
          %185 = sbr.rel (%p183) target = $region20
        $region19: #{tpu_custom_call.1} parent=11 // pred_region
          _
        $region20: #{tpu_custom_call.1} parent=11 // pred_fallthru
          _
        // Predicated region
        $region21: #{tpu_custom_call.1} parent=11 // pred_check
          %p186 = pneg %p107
        $region22: #{tpu_custom_call.1} parent=11 // pred_check_branch
          %188 = sbr.rel (%p186) target = $region24
        $region23: #{tpu_custom_call.1} parent=11 // pred_region
          %190 = vsyncadd [#allocation6], 0
          %s191 = sshll.u32 %s3, 4
          %s192 = int_to_ptr.hbm [resolvable:$true] %s191
          %s193 = sshll.u32 [#allocation7], 4
          %s194 = int_to_ptr.vmem [resolvable:$true] %s193
          %199 = dma.hbm_to_vmem [thread:$0]  %s192, 2048, %s194, [#allocation6], 128, 128, 8
        $region24: #{tpu_custom_call.1} parent=11 // pred_fallthru
          _
        // Predicated region
        $region25: #{tpu_custom_call.1} parent=11 // pred_check
          %p200 = pneg %p128
        $region26: #{tpu_custom_call.1} parent=11 // pred_check_branch
          %202 = sbr.rel (%p200) target = $region28
        $region27: #{tpu_custom_call.1} parent=11 // pred_region
          _
        $region28: #{tpu_custom_call.1} parent=11 // pred_fallthru
          _
      $region12: #{tpu_custom_call.1} parent=5 // pred_fallthru
        _
      %p203 = scmp.lt.s32.totalorder %s18, 2
      // Predicated region
      $region29: #{tpu_custom_call.1} parent=5 // pred_check
        %p204 = pneg %p203
      $region30: #{tpu_custom_call.1} parent=5 // pred_check_branch
        %206 = sbr.rel (%p204) target = $region32
      $region31: #{tpu_custom_call.1} parent=5 // pred_region
        // Predicated region
        $region33: #{tpu_custom_call.1} parent=31 // pred_check
          %p207 = pneg %p38
        $region34: #{tpu_custom_call.1} parent=31 // pred_check_branch
          %209 = sbr.rel (%p207) target = $region36
        $region35: #{tpu_custom_call.1} parent=31 // pred_region
          %s210 = sand.u32 %s28, 1
          %s211 = scalar_lea.sflag [#allocation3], %s210
          %s212 = sand.u32 %s28, 1
          %s213 = smul.addr %s212, 256
          %s214 = scalar_lea.vmem [#allocation2], %s213
          %s215 = smul.u32 32, %s18
          %217 = vsyncadd %s211, 0
          %s218 = smul.addr %s215, 8
          %s219 = scalar_lea.hbm %s0, %s218
          %s220 = sshll.u32 %s219, 4
          %s221 = int_to_ptr.hbm [resolvable:$true] %s220
          %s222 = sshll.u32 %s214, 4
          %s223 = int_to_ptr.vmem [resolvable:$true] %s222
          %228 = dma.hbm_to_vmem [thread:$0]  %s221, 4096, %s223, %s211, 128, 128, 8
        $region36: #{tpu_custom_call.1} parent=31 // pred_fallthru
          _
      $region32: #{tpu_custom_call.1} parent=5 // pred_fallthru
        _
      %p229 = scmp.le.s32.totalorder 1, %s18
      %p230 = scmp.lt.s32.totalorder %s18, 3
      %p231 = pnand %p229, %p230
      %p232 = pneg %p231
      // Predicated region
      $region37: #{tpu_custom_call.1} parent=5 // pred_check
        _
      $region38: #{tpu_custom_call.1} parent=5 // pred_check_branch
        %234 = sbr.rel (%p231) target = $region40
      $region39: #{tpu_custom_call.1} parent=5 // pred_region
        %s235 = ssub.s32 %s18, 1
        %s236 = sand.u32 %s31, 1
        %s237 = scalar_lea.sflag [#allocation3], %s236
        %s238 = sand.u32 %s31, 1
        %s239 = smul.addr %s238, 256
        %s240 = scalar_lea.vmem [#allocation2], %s239
        // Predicated region
        $region41: #{tpu_custom_call.1} parent=39 // pred_check
          %p241 = pneg %p44
        $region42: #{tpu_custom_call.1} parent=39 // pred_check_branch
          %243 = sbr.rel (%p241) target = $region44
        $region43: #{tpu_custom_call.1} parent=39 // pred_region
          %245 = dma.done %s237, 4096
        $region44: #{tpu_custom_call.1} parent=39 // pred_fallthru
          _
        // Predicated region
        $region45: #{tpu_custom_call.1} parent=39 // pred_check
          %p246 = pneg %p65
        $region46: #{tpu_custom_call.1} parent=39 // pred_check_branch
          %248 = sbr.rel (%p246) target = $region48
        $region47: #{tpu_custom_call.1} parent=39 // pred_region
          %250 = dma.done [#allocation6], 2048
        $region48: #{tpu_custom_call.1} parent=39 // pred_fallthru
          _
        // Predicated region
        $region49: #{tpu_custom_call.1} parent=39 // pred_check
          %p251 = pneg %p107
        $region50: #{tpu_custom_call.1} parent=39 // pred_check_branch
          %253 = sbr.rel (%p251) target = $region52
        $region51: #{tpu_custom_call.1} parent=39 // pred_region
          %255 = dma.done [#allocation6], 2048
        $region52: #{tpu_custom_call.1} parent=39 // pred_fallthru
          _
        %s256 = sand.u32 %s31, 1
        %s257 = scalar_lea.sflag [#allocation3], %s256
        %s258 = sand.u32 %s31, 1
        %s259 = smul.addr %s258, 256
        %s260 = scalar_lea.vmem [#allocation2], %s259
        %p261 = pneg %p44
        %p262 = pneg %p41
        %p263 = pneg %p65
        %p264 = pneg %p62
        %p265 = pneg %p86
        %p266 = pneg %p83
        %p267 = pneg %p107
        %p268 = pneg %p104
        %p269 = pneg %p128
        %p270 = pneg %p125
        %p271 = pneg %p154
        %p272 = pneg %p151
        %s273 = sand.u32 %s141, 1
        %s274 = scalar_lea.sflag [#allocation4], %s273
        %s275 = sand.u32 %s141, 1
        %s276 = smul.addr %s275, 256
        %s277 = scalar_lea.vmem [#allocation8], %s276
        %s278 = smul.u32 32, %s23
        %s279 = smul.u32 32, %s23
        %v280 = vld [vmem:[%s240] sm:$0xff]
        %v281 = vld [vmem:[%s240 + $0x8] sm:$0xff]
        %v282 = vld [vmem:[%s240 + $0x10] sm:$0xff]
        %v283 = vld [vmem:[%s240 + $0x18] sm:$0xff]
        %v284 = vld [vmem:[%s240 + $0x20] sm:$0xff]
        %v285 = vld [vmem:[%s240 + $0x28] sm:$0xff]
        %v286 = vld [vmem:[%s240 + $0x30] sm:$0xff]
        %v287 = vld [vmem:[%s240 + $0x38] sm:$0xff]
        %v288 = vld [vmem:[%s240 + $0x40] sm:$0xff]
        %v289 = vld [vmem:[%s240 + $0x48] sm:$0xff]
        %v290 = vld [vmem:[%s240 + $0x50] sm:$0xff]
        %v291 = vld [vmem:[%s240 + $0x58] sm:$0xff]
        %v292 = vld [vmem:[%s240 + $0x60] sm:$0xff]
        %v293 = vld [vmem:[%s240 + $0x68] sm:$0xff]
        %v294 = vld [vmem:[%s240 + $0x70] sm:$0xff]
        %v295 = vld [vmem:[%s240 + $0x78] sm:$0xff]
        %v296 = vld [vmem:[%s240 + $0x80] sm:$0xff]
        %v297 = vld [vmem:[%s240 + $0x88] sm:$0xff]
        %v298 = vld [vmem:[%s240 + $0x90] sm:$0xff]
        %v299 = vld [vmem:[%s240 + $0x98] sm:$0xff]
        %v300 = vld [vmem:[%s240 + $0xa0] sm:$0xff]
        %v301 = vld [vmem:[%s240 + $0xa8] sm:$0xff]
        %v302 = vld [vmem:[%s240 + $0xb0] sm:$0xff]
        %v303 = vld [vmem:[%s240 + $0xb8] sm:$0xff]
        %v304 = vld [vmem:[%s240 + $0xc0] sm:$0xff]
        %v305 = vld [vmem:[%s240 + $0xc8] sm:$0xff]
        %v306 = vld [vmem:[%s240 + $0xd0] sm:$0xff]
        %v307 = vld [vmem:[%s240 + $0xd8] sm:$0xff]
        %v308 = vld [vmem:[%s240 + $0xe0] sm:$0xff]
        %v309 = vld [vmem:[%s240 + $0xe8] sm:$0xff]
        %v310 = vld [vmem:[%s240 + $0xf0] sm:$0xff]
        %v311 = vld [vmem:[%s240 + $0xf8] sm:$0xff]
        %v312 = vld [vmem:[#allocation5] sm:$0xff]
        %v313 = vld [vmem:[#allocation5 + $0x8] sm:$0xff]
        %v314 = vld [vmem:[#allocation5 + $0x10] sm:$0xff]
        %v315 = vld [vmem:[#allocation5 + $0x18] sm:$0xff]
        %v316 = vld [vmem:[#allocation5 + $0x20] sm:$0xff]
        %v317 = vld [vmem:[#allocation5 + $0x28] sm:$0xff]
        %v318 = vld [vmem:[#allocation5 + $0x30] sm:$0xff]
        %v319 = vld [vmem:[#allocation5 + $0x38] sm:$0xff]
        %v320 = vld [vmem:[#allocation5 + $0x40] sm:$0xff]
        %v321 = vld [vmem:[#allocation5 + $0x48] sm:$0xff]
        %v322 = vld [vmem:[#allocation5 + $0x50] sm:$0xff]
        %v323 = vld [vmem:[#allocation5 + $0x58] sm:$0xff]
        %v324 = vld [vmem:[#allocation5 + $0x60] sm:$0xff]
        %v325 = vld [vmem:[#allocation5 + $0x68] sm:$0xff]
        %v326 = vld [vmem:[#allocation5 + $0x70] sm:$0xff]
        %v327 = vld [vmem:[#allocation5 + $0x78] sm:$0xff]
        %v328 = vld [vmem:[%s2] sm:$0x1]
        %v330 = vperm.slane %v328, 0
        %332 = vmatpush.msra.mxu0 %v327
        %333 = vmatpush.msra.mxu0 %v326
        %334 = vmatpush.msra.mxu0 %v325
        %335 = vmatpush.msra.mxu0 %v324
        %336 = vmatpush.msra.mxu0 %v323
        %337 = vmatpush.msra.mxu0 %v322
        %338 = vmatpush.msra.mxu0 %v321
        %339 = vmatpush.msra.mxu0 %v320
        %340 = vmatpush.msra.mxu0 %v319
        %341 = vmatpush.msra.mxu0 %v318
        %342 = vmatpush.msra.mxu0 %v317
        %343 = vmatpush.msra.mxu0 %v316
        %344 = vmatpush.msra.mxu0 %v315
        %345 = vmatpush.msra.mxu0 %v314
        %346 = vmatpush.msra.mxu0 %v313
        %347 = vmatpush.msra.mxu0 %v312
        %348 = vmatmul.f32.gmra.mxu0 %v280
        %v349 = vpop.f32.mrf.mxu0
        %v350 = vadd.f32 %v330, %v349
        %351 = vmatmul.f32.gmra.mxu0 %v281
        %v352 = vpop.f32.mrf.mxu0
        %v353 = vadd.f32 %v330, %v352
        %354 = vmatmul.f32.gmra.mxu0 %v282
        %v355 = vpop.f32.mrf.mxu0
        %v356 = vadd.f32 %v330, %v355
        %357 = vmatmul.f32.gmra.mxu0 %v283
        %v358 = vpop.f32.mrf.mxu0
        %v359 = vadd.f32 %v330, %v358
        %360 = vmatmul.f32.gmra.mxu0 %v284
        %v361 = vpop.f32.mrf.mxu0
        %v362 = vadd.f32 %v330, %v361
        %363 = vmatmul.f32.gmra.mxu0 %v285
        %v364 = vpop.f32.mrf.mxu0
        %v365 = vadd.f32 %v330, %v364
        %366 = vmatmul.f32.gmra.mxu0 %v286
        %v367 = vpop.f32.mrf.mxu0
        %v368 = vadd.f32 %v330, %v367
        %369 = vmatmul.f32.gmra.mxu0 %v287
        %v370 = vpop.f32.mrf.mxu0
        %v371 = vadd.f32 %v330, %v370
        %372 = vmatmul.f32.gmra.mxu0 %v288
        %v373 = vpop.f32.mrf.mxu0
        %v374 = vadd.f32 %v330, %v373
        %375 = vmatmul.f32.gmra.mxu0 %v289
        %v376 = vpop.f32.mrf.mxu0
        %v377 = vadd.f32 %v330, %v376
        %378 = vmatmul.f32.gmra.mxu0 %v290
        %v379 = vpop.f32.mrf.mxu0
        %v380 = vadd.f32 %v330, %v379
        %381 = vmatmul.f32.gmra.mxu0 %v291
        %v382 = vpop.f32.mrf.mxu0
        %v383 = vadd.f32 %v330, %v382
        %384 = vmatmul.f32.gmra.mxu0 %v292
        %v385 = vpop.f32.mrf.mxu0
        %v386 = vadd.f32 %v330, %v385
        %387 = vmatmul.f32.gmra.mxu0 %v293
        %v388 = vpop.f32.mrf.mxu0
        %v389 = vadd.f32 %v330, %v388
        %390 = vmatmul.f32.gmra.mxu0 %v294
        %v391 = vpop.f32.mrf.mxu0
        %v392 = vadd.f32 %v330, %v391
        %393 = vmatmul.f32.gmra.mxu0 %v295
        %v394 = vpop.f32.mrf.mxu0
        %v395 = vadd.f32 %v330, %v394
        %396 = vmatmul.f32.gmra.mxu0 %v296
        %v397 = vpop.f32.mrf.mxu0
        %v398 = vadd.f32 %v330, %v397
        %399 = vmatmul.f32.gmra.mxu0 %v297
        %v400 = vpop.f32.mrf.mxu0
        %v401 = vadd.f32 %v330, %v400
        %402 = vmatmul.f32.gmra.mxu0 %v298
        %v403 = vpop.f32.mrf.mxu0
        %v404 = vadd.f32 %v330, %v403
        %405 = vmatmul.f32.gmra.mxu0 %v299
        %v406 = vpop.f32.mrf.mxu0
        %v407 = vadd.f32 %v330, %v406
        %408 = vmatmul.f32.gmra.mxu0 %v300
        %v409 = vpop.f32.mrf.mxu0
        %v410 = vadd.f32 %v330, %v409
        %411 = vmatmul.f32.gmra.mxu0 %v301
        %v412 = vpop.f32.mrf.mxu0
        %v413 = vadd.f32 %v330, %v412
        %414 = vmatmul.f32.gmra.mxu0 %v302
        %v415 = vpop.f32.mrf.mxu0
        %v416 = vadd.f32 %v330, %v415
        %417 = vmatmul.f32.gmra.mxu0 %v303
        %v418 = vpop.f32.mrf.mxu0
        %v419 = vadd.f32 %v330, %v418
        %420 = vmatmul.f32.gmra.mxu0 %v304
        %v421 = vpop.f32.mrf.mxu0
        %v422 = vadd.f32 %v330, %v421
        %423 = vmatmul.f32.gmra.mxu0 %v305
        %v424 = vpop.f32.mrf.mxu0
        %v425 = vadd.f32 %v330, %v424
        %426 = vmatmul.f32.gmra.mxu0 %v306
        %v427 = vpop.f32.mrf.mxu0
        %v428 = vadd.f32 %v330, %v427
        %429 = vmatmul.f32.gmra.mxu0 %v307
        %v430 = vpop.f32.mrf.mxu0
        %v431 = vadd.f32 %v330, %v430
        %432 = vmatmul.f32.gmra.mxu0 %v308
        %v433 = vpop.f32.mrf.mxu0
        %v434 = vadd.f32 %v330, %v433
        %435 = vmatmul.f32.gmra.mxu0 %v309
        %v436 = vpop.f32.mrf.mxu0
        %v437 = vadd.f32 %v330, %v436
        %438 = vmatmul.f32.gmra.mxu0 %v310
        %v439 = vpop.f32.mrf.mxu0
        %v440 = vadd.f32 %v330, %v439
        %441 = vmatmul.f32.gmra.mxu0 %v311
        %v442 = vpop.f32.mrf.mxu0
        %v443 = vadd.f32 %v330, %v442
        %444 = vdwg.mxu0
        %v445 = vmul.f32 %v350, 0.5
        %v446 = vmul.f32 %v353, 0.5
        %v447 = vmul.f32 %v356, 0.5
        %v448 = vmul.f32 %v359, 0.5
        %v449 = vmul.f32 %v362, 0.5
        %v450 = vmul.f32 %v365, 0.5
        %v451 = vmul.f32 %v368, 0.5
        %v452 = vmul.f32 %v371, 0.5
        %v453 = vmul.f32 %v374, 0.5
        %v454 = vmul.f32 %v377, 0.5
        %v455 = vmul.f32 %v380, 0.5
        %v456 = vmul.f32 %v383, 0.5
        %v457 = vmul.f32 %v386, 0.5
        %v458 = vmul.f32 %v389, 0.5
        %v459 = vmul.f32 %v392, 0.5
        %v460 = vmul.f32 %v395, 0.5
        %v461 = vmul.f32 %v398, 0.5
        %v462 = vmul.f32 %v401, 0.5
        %v463 = vmul.f32 %v404, 0.5
        %v464 = vmul.f32 %v407, 0.5
        %v465 = vmul.f32 %v410, 0.5
        %v466 = vmul.f32 %v413, 0.5
        %v467 = vmul.f32 %v416, 0.5
        %v468 = vmul.f32 %v419, 0.5
        %v469 = vmul.f32 %v422, 0.5
        %v470 = vmul.f32 %v425, 0.5
        %v471 = vmul.f32 %v428, 0.5
        %v472 = vmul.f32 %v431, 0.5
        %v473 = vmul.f32 %v434, 0.5
        %v474 = vmul.f32 %v437, 0.5
        %v475 = vmul.f32 %v440, 0.5
        %v476 = vmul.f32 %v443, 0.5
        %v477 = vrcp.pop 1.4142135
        %v478 = vmul.f32 1.4142135, %v477
        %v479 = vsub.f32 1.0, %v478
        %v480 = vmul.f32 %v477, %v479
        %v481 = vadd.f32 %v477, %v480
        %vm482 = vweird.f32 %v477
        %v483 = vsel %vm482, %v477, %v481
        %v484 = vmul.f32 %v350, %v483
        %v485 = vmul.f32 %v353, %v483
        %v486 = vmul.f32 %v356, %v483
        %v487 = vmul.f32 %v359, %v483
        %v488 = vmul.f32 %v362, %v483
        %v489 = vmul.f32 %v365, %v483
        %v490 = vmul.f32 %v368, %v483
        %v491 = vmul.f32 %v371, %v483
        %v492 = vmul.f32 %v374, %v483
        %v493 = vmul.f32 %v377, %v483
        %v494 = vmul.f32 %v380, %v483
        %v495 = vmul.f32 %v383, %v483
        %v496 = vmul.f32 %v386, %v483
        %v497 = vmul.f32 %v389, %v483
        %v498 = vmul.f32 %v392, %v483
        %v499 = vmul.f32 %v395, %v483
        %v500 = vmul.f32 %v398, %v483
        %v501 = vmul.f32 %v401, %v483
        %v502 = vmul.f32 %v404, %v483
        %v503 = vmul.f32 %v407, %v483
        %v504 = vmul.f32 %v410, %v483
        %v505 = vmul.f32 %v413, %v483
        %v506 = vmul.f32 %v416, %v483
        %v507 = vmul.f32 %v419, %v483
        %v508 = vmul.f32 %v422, %v483
        %v509 = vmul.f32 %v425, %v483
        %v510 = vmul.f32 %v428, %v483
        %v511 = vmul.f32 %v431, %v483
        %v512 = vmul.f32 %v434, %v483
        %v513 = vmul.f32 %v437, %v483
        %v514 = vmul.f32 %v440, %v483
        %v515 = vmul.f32 %v443, %v483
        %v516 = vmul.f32 %v484, %v484
        %v517 = vmin.f32 16.0, %v516
        %v518 = vmul.f32 %v517, 2.1237322e-06
        %v519 = vadd.f32 %v518, 0.00028619796
        %v520 = vmul.f32 %v517, %v519
        %v521 = vadd.f32 %v520, 0.0036580483
        %v522 = vmul.f32 %v517, %v521
        %v523 = vadd.f32 %v522, 0.05243302
        %v524 = vmul.f32 %v517, %v523
        %v525 = vadd.f32 %v524, 0.18741608
        %v526 = vmul.f32 %v517, %v525
        %v527 = vadd.f32 %v526, 1.1283791
        %v528 = vmul.f32 %v484, %v527
        %v529 = vmul.f32 %v517, 3.8918573e-05
        %v530 = vadd.f32 %v529, 0.001143296
        %v531 = vmul.f32 %v517, %v530
        %v532 = vadd.f32 %v531, 0.014752088
        %v533 = vmul.f32 %v517, %v532
        %v534 = vadd.f32 %v533, 0.112945676
        %v535 = vmul.f32 %v517, %v534
        %v536 = vadd.f32 %v535, 0.4994258
        %v537 = vmul.f32 %v517, %v536
        %v538 = vadd.f32 %v537, 1.0
        %v539 = vrcp.pop %v538
        %v540 = vmul.f32 %v538, %v539
        %v541 = vsub.f32 1.0, %v540
        %v542 = vmul.f32 %v539, %v541
        %v543 = vadd.f32 %v539, %v542
        %vm544 = vweird.f32 %v538
        %vm545 = vweird.f32 %v539
        %vm546 = vmor %vm544, %vm545
        %v547 = vsel %vm546, %v539, %v543
        %v548 = vand.u32 2147483647, %v538
        %vm549 = vcmp.eq.f32.partialorder %v548, 8.507059e+37
        %v550 = vand.u32 %v538, 2147483648
        %v551 = vor.u32 1.1754944e-38, %v550
        %v552 = vsel %vm549, %v551, %v547
        %v553 = vmul.f32 %v528, %v552
        %v554 = vmin.f32 %v553, 1.0
        %v555 = vmax.f32 %v554, -1.0
        %v556 = vmul.f32 %v485, %v485
        %v557 = vmin.f32 16.0, %v556
        %v558 = vmul.f32 %v557, 2.1237322e-06
        %v559 = vadd.f32 %v558, 0.00028619796
        %v560 = vmul.f32 %v557, %v559
        %v561 = vadd.f32 %v560, 0.0036580483
        %v562 = vmul.f32 %v557, %v561
        %v563 = vadd.f32 %v562, 0.05243302
        %v564 = vmul.f32 %v557, %v563
        %v565 = vadd.f32 %v564, 0.18741608
        %v566 = vmul.f32 %v557, %v565
        %v567 = vadd.f32 %v566, 1.1283791
        %v568 = vmul.f32 %v485, %v567
        %v569 = vmul.f32 %v557, 3.8918573e-05
        %v570 = vadd.f32 %v569, 0.001143296
        %v571 = vmul.f32 %v557, %v570
        %v572 = vadd.f32 %v571, 0.014752088
        %v573 = vmul.f32 %v557, %v572
        %v574 = vadd.f32 %v573, 0.112945676
        %v575 = vmul.f32 %v557, %v574
        %v576 = vadd.f32 %v575, 0.4994258
        %v577 = vmul.f32 %v557, %v576
        %v578 = vadd.f32 %v577, 1.0
        %v579 = vrcp.pop %v578
        %v580 = vmul.f32 %v578, %v579
        %v581 = vsub.f32 1.0, %v580
        %v582 = vmul.f32 %v579, %v581
        %v583 = vadd.f32 %v579, %v582
        %vm584 = vweird.f32 %v578
        %vm585 = vweird.f32 %v579
        %vm586 = vmor %vm584, %vm585
        %v587 = vsel %vm586, %v579, %v583
        %v588 = vand.u32 2147483647, %v578
        %vm589 = vcmp.eq.f32.partialorder %v588, 8.507059e+37
        %v590 = vand.u32 %v578, 2147483648
        %v591 = vor.u32 1.1754944e-38, %v590
        %v592 = vsel %vm589, %v591, %v587
        %v593 = vmul.f32 %v568, %v592
        %v594 = vmin.f32 %v593, 1.0
        %v595 = vmax.f32 %v594, -1.0
        %v596 = vmul.f32 %v486, %v486
        %v597 = vmin.f32 16.0, %v596
        %v598 = vmul.f32 %v597, 2.1237322e-06
        %v599 = vadd.f32 %v598, 0.00028619796
        %v600 = vmul.f32 %v597, %v599
        %v601 = vadd.f32 %v600, 0.0036580483
        %v602 = vmul.f32 %v597, %v601
        %v603 = vadd.f32 %v602, 0.05243302
        %v604 = vmul.f32 %v597, %v603
        %v605 = vadd.f32 %v604, 0.18741608
        %v606 = vmul.f32 %v597, %v605
        %v607 = vadd.f32 %v606, 1.1283791
        %v608 = vmul.f32 %v486, %v607
        %v609 = vmul.f32 %v597, 3.8918573e-05
        %v610 = vadd.f32 %v609, 0.001143296
        %v611 = vmul.f32 %v597, %v610
        %v612 = vadd.f32 %v611, 0.014752088
        %v613 = vmul.f32 %v597, %v612
        %v614 = vadd.f32 %v613, 0.112945676
        %v615 = vmul.f32 %v597, %v614
        %v616 = vadd.f32 %v615, 0.4994258
        %v617 = vmul.f32 %v597, %v616
        %v618 = vadd.f32 %v617, 1.0
        %v619 = vrcp.pop %v618
        %v620 = vmul.f32 %v618, %v619
        %v621 = vsub.f32 1.0, %v620
        %v622 = vmul.f32 %v619, %v621
        %v623 = vadd.f32 %v619, %v622
        %vm624 = vweird.f32 %v618
        %vm625 = vweird.f32 %v619
        %vm626 = vmor %vm624, %vm625
        %v627 = vsel %vm626, %v619, %v623
        %v628 = vand.u32 2147483647, %v618
        %vm629 = vcmp.eq.f32.partialorder %v628, 8.507059e+37
        %v630 = vand.u32 %v618, 2147483648
        %v631 = vor.u32 1.1754944e-38, %v630
        %v632 = vsel %vm629, %v631, %v627
        %v633 = vmul.f32 %v608, %v632
        %v634 = vmin.f32 %v633, 1.0
        %v635 = vmax.f32 %v634, -1.0
        %v636 = vmul.f32 %v487, %v487
        %v637 = vmin.f32 16.0, %v636
        %v638 = vmul.f32 %v637, 2.1237322e-06
        %v639 = vadd.f32 %v638, 0.00028619796
        %v640 = vmul.f32 %v637, %v639
        %v641 = vadd.f32 %v640, 0.0036580483
        %v642 = vmul.f32 %v637, %v641
        %v643 = vadd.f32 %v642, 0.05243302
        %v644 = vmul.f32 %v637, %v643
        %v645 = vadd.f32 %v644, 0.18741608
        %v646 = vmul.f32 %v637, %v645
        %v647 = vadd.f32 %v646, 1.1283791
        %v648 = vmul.f32 %v487, %v647
        %v649 = vmul.f32 %v637, 3.8918573e-05
        %v650 = vadd.f32 %v649, 0.001143296
        %v651 = vmul.f32 %v637, %v650
        %v652 = vadd.f32 %v651, 0.014752088
        %v653 = vmul.f32 %v637, %v652
        %v654 = vadd.f32 %v653, 0.112945676
        %v655 = vmul.f32 %v637, %v654
        %v656 = vadd.f32 %v655, 0.4994258
        %v657 = vmul.f32 %v637, %v656
        %v658 = vadd.f32 %v657, 1.0
        %v659 = vrcp.pop %v658
        %v660 = vmul.f32 %v658, %v659
        %v661 = vsub.f32 1.0, %v660
        %v662 = vmul.f32 %v659, %v661
        %v663 = vadd.f32 %v659, %v662
        %vm664 = vweird.f32 %v658
        %vm665 = vweird.f32 %v659
        %vm666 = vmor %vm664, %vm665
        %v667 = vsel %vm666, %v659, %v663
        %v668 = vand.u32 2147483647, %v658
        %vm669 = vcmp.eq.f32.partialorder %v668, 8.507059e+37
        %v670 = vand.u32 %v658, 2147483648
        %v671 = vor.u32 1.1754944e-38, %v670
        %v672 = vsel %vm669, %v671, %v667
        %v673 = vmul.f32 %v648, %v672
        %v674 = vmin.f32 %v673, 1.0
        %v675 = vmax.f32 %v674, -1.0
        %v676 = vmul.f32 %v488, %v488
        %v677 = vmin.f32 16.0, %v676
        %v678 = vmul.f32 %v677, 2.1237322e-06
        %v679 = vadd.f32 %v678, 0.00028619796
        %v680 = vmul.f32 %v677, %v679
        %v681 = vadd.f32 %v680, 0.0036580483
        %v682 = vmul.f32 %v677, %v681
        %v683 = vadd.f32 %v682, 0.05243302
        %v684 = vmul.f32 %v677, %v683
        %v685 = vadd.f32 %v684, 0.18741608
        %v686 = vmul.f32 %v677, %v685
        %v687 = vadd.f32 %v686, 1.1283791
        %v688 = vmul.f32 %v488, %v687
        %v689 = vmul.f32 %v677, 3.8918573e-05
        %v690 = vadd.f32 %v689, 0.001143296
        %v691 = vmul.f32 %v677, %v690
        %v692 = vadd.f32 %v691, 0.014752088
        %v693 = vmul.f32 %v677, %v692
        %v694 = vadd.f32 %v693, 0.112945676
        %v695 = vmul.f32 %v677, %v694
        %v696 = vadd.f32 %v695, 0.4994258
        %v697 = vmul.f32 %v677, %v696
        %v698 = vadd.f32 %v697, 1.0
        %v699 = vrcp.pop %v698
        %v700 = vmul.f32 %v698, %v699
        %v701 = vsub.f32 1.0, %v700
        %v702 = vmul.f32 %v699, %v701
        %v703 = vadd.f32 %v699, %v702
        %vm704 = vweird.f32 %v698
        %vm705 = vweird.f32 %v699
        %vm706 = vmor %vm704, %vm705
        %v707 = vsel %vm706, %v699, %v703
        %v708 = vand.u32 2147483647, %v698
        %vm709 = vcmp.eq.f32.partialorder %v708, 8.507059e+37
        %v710 = vand.u32 %v698, 2147483648
        %v711 = vor.u32 1.1754944e-38, %v710
        %v712 = vsel %vm709, %v711, %v707
        %v713 = vmul.f32 %v688, %v712
        %v714 = vmin.f32 %v713, 1.0
        %v715 = vmax.f32 %v714, -1.0
        %v716 = vmul.f32 %v489, %v489
        %v717 = vmin.f32 16.0, %v716
        %v718 = vmul.f32 %v717, 2.1237322e-06
        %v719 = vadd.f32 %v718, 0.00028619796
        %v720 = vmul.f32 %v717, %v719
        %v721 = vadd.f32 %v720, 0.0036580483
        %v722 = vmul.f32 %v717, %v721
        %v723 = vadd.f32 %v722, 0.05243302
        %v724 = vmul.f32 %v717, %v723
        %v725 = vadd.f32 %v724, 0.18741608
        %v726 = vmul.f32 %v717, %v725
        %v727 = vadd.f32 %v726, 1.1283791
        %v728 = vmul.f32 %v489, %v727
        %v729 = vmul.f32 %v717, 3.8918573e-05
        %v730 = vadd.f32 %v729, 0.001143296
        %v731 = vmul.f32 %v717, %v730
        %v732 = vadd.f32 %v731, 0.014752088
        %v733 = vmul.f32 %v717, %v732
        %v734 = vadd.f32 %v733, 0.112945676
        %v735 = vmul.f32 %v717, %v734
        %v736 = vadd.f32 %v735, 0.4994258
        %v737 = vmul.f32 %v717, %v736
        %v738 = vadd.f32 %v737, 1.0
        %v739 = vrcp.pop %v738
        %v740 = vmul.f32 %v738, %v739
        %v741 = vsub.f32 1.0, %v740
        %v742 = vmul.f32 %v739, %v741
        %v743 = vadd.f32 %v739, %v742
        %vm744 = vweird.f32 %v738
        %vm745 = vweird.f32 %v739
        %vm746 = vmor %vm744, %vm745
        %v747 = vsel %vm746, %v739, %v743
        %v748 = vand.u32 2147483647, %v738
        %vm749 = vcmp.eq.f32.partialorder %v748, 8.507059e+37
        %v750 = vand.u32 %v738, 2147483648
        %v751 = vor.u32 1.1754944e-38, %v750
        %v752 = vsel %vm749, %v751, %v747
        %v753 = vmul.f32 %v728, %v752
        %v754 = vmin.f32 %v753, 1.0
        %v755 = vmax.f32 %v754, -1.0
        %v756 = vmul.f32 %v490, %v490
        %v757 = vmin.f32 16.0, %v756
        %v758 = vmul.f32 %v757, 2.1237322e-06
        %v759 = vadd.f32 %v758, 0.00028619796
        %v760 = vmul.f32 %v757, %v759
        %v761 = vadd.f32 %v760, 0.0036580483
        %v762 = vmul.f32 %v757, %v761
        %v763 = vadd.f32 %v762, 0.05243302
        %v764 = vmul.f32 %v757, %v763
        %v765 = vadd.f32 %v764, 0.18741608
        %v766 = vmul.f32 %v757, %v765
        %v767 = vadd.f32 %v766, 1.1283791
        %v768 = vmul.f32 %v490, %v767
        %v769 = vmul.f32 %v757, 3.8918573e-05
        %v770 = vadd.f32 %v769, 0.001143296
        %v771 = vmul.f32 %v757, %v770
        %v772 = vadd.f32 %v771, 0.014752088
        %v773 = vmul.f32 %v757, %v772
        %v774 = vadd.f32 %v773, 0.112945676
        %v775 = vmul.f32 %v757, %v774
        %v776 = vadd.f32 %v775, 0.4994258
        %v777 = vmul.f32 %v757, %v776
        %v778 = vadd.f32 %v777, 1.0
        %v779 = vrcp.pop %v778
        %v780 = vmul.f32 %v778, %v779
        %v781 = vsub.f32 1.0, %v780
        %v782 = vmul.f32 %v779, %v781
        %v783 = vadd.f32 %v779, %v782
        %vm784 = vweird.f32 %v778
        %vm785 = vweird.f32 %v779
        %vm786 = vmor %vm784, %vm785
        %v787 = vsel %vm786, %v779, %v783
        %v788 = vand.u32 2147483647, %v778
        %vm789 = vcmp.eq.f32.partialorder %v788, 8.507059e+37
        %v790 = vand.u32 %v778, 2147483648
        %v791 = vor.u32 1.1754944e-38, %v790
        %v792 = vsel %vm789, %v791, %v787
        %v793 = vmul.f32 %v768, %v792
        %v794 = vmin.f32 %v793, 1.0
        %v795 = vmax.f32 %v794, -1.0
        %v796 = vmul.f32 %v491, %v491
        %v797 = vmin.f32 16.0, %v796
        %v798 = vmul.f32 %v797, 2.1237322e-06
        %v799 = vadd.f32 %v798, 0.00028619796
        %v800 = vmul.f32 %v797, %v799
        %v801 = vadd.f32 %v800, 0.0036580483
        %v802 = vmul.f32 %v797, %v801
        %v803 = vadd.f32 %v802, 0.05243302
        %v804 = vmul.f32 %v797, %v803
        %v805 = vadd.f32 %v804, 0.18741608
        %v806 = vmul.f32 %v797, %v805
        %v807 = vadd.f32 %v806, 1.1283791
        %v808 = vmul.f32 %v491, %v807
        %v809 = vmul.f32 %v797, 3.8918573e-05
        %v810 = vadd.f32 %v809, 0.001143296
        %v811 = vmul.f32 %v797, %v810
        %v812 = vadd.f32 %v811, 0.014752088
        %v813 = vmul.f32 %v797, %v812
        %v814 = vadd.f32 %v813, 0.112945676
        %v815 = vmul.f32 %v797, %v814
        %v816 = vadd.f32 %v815, 0.4994258
        %v817 = vmul.f32 %v797, %v816
        %v818 = vadd.f32 %v817, 1.0
        %v819 = vrcp.pop %v818
        %v820 = vmul.f32 %v818, %v819
        %v821 = vsub.f32 1.0, %v820
        %v822 = vmul.f32 %v819, %v821
        %v823 = vadd.f32 %v819, %v822
        %vm824 = vweird.f32 %v818
        %vm825 = vweird.f32 %v819
        %vm826 = vmor %vm824, %vm825
        %v827 = vsel %vm826, %v819, %v823
        %v828 = vand.u32 2147483647, %v818
        %vm829 = vcmp.eq.f32.partialorder %v828, 8.507059e+37
        %v830 = vand.u32 %v818, 2147483648
        %v831 = vor.u32 1.1754944e-38, %v830
        %v832 = vsel %vm829, %v831, %v827
        %v833 = vmul.f32 %v808, %v832
        %v834 = vmin.f32 %v833, 1.0
        %v835 = vmax.f32 %v834, -1.0
        %v836 = vmul.f32 %v492, %v492
        %v837 = vmin.f32 16.0, %v836
        %v838 = vmul.f32 %v837, 2.1237322e-06
        %v839 = vadd.f32 %v838, 0.00028619796
        %v840 = vmul.f32 %v837, %v839
        %v841 = vadd.f32 %v840, 0.0036580483
        %v842 = vmul.f32 %v837, %v841
        %v843 = vadd.f32 %v842, 0.05243302
        %v844 = vmul.f32 %v837, %v843
        %v845 = vadd.f32 %v844, 0.18741608
        %v846 = vmul.f32 %v837, %v845
        %v847 = vadd.f32 %v846, 1.1283791
        %v848 = vmul.f32 %v492, %v847
        %v849 = vmul.f32 %v837, 3.8918573e-05
        %v850 = vadd.f32 %v849, 0.001143296
        %v851 = vmul.f32 %v837, %v850
        %v852 = vadd.f32 %v851, 0.014752088
        %v853 = vmul.f32 %v837, %v852
        %v854 = vadd.f32 %v853, 0.112945676
        %v855 = vmul.f32 %v837, %v854
        %v856 = vadd.f32 %v855, 0.4994258
        %v857 = vmul.f32 %v837, %v856
        %v858 = vadd.f32 %v857, 1.0
        %v859 = vrcp.pop %v858
        %v860 = vmul.f32 %v858, %v859
        %v861 = vsub.f32 1.0, %v860
        %v862 = vmul.f32 %v859, %v861
        %v863 = vadd.f32 %v859, %v862
        %vm864 = vweird.f32 %v858
        %vm865 = vweird.f32 %v859
        %vm866 = vmor %vm864, %vm865
        %v867 = vsel %vm866, %v859, %v863
        %v868 = vand.u32 2147483647, %v858
        %vm869 = vcmp.eq.f32.partialorder %v868, 8.507059e+37
        %v870 = vand.u32 %v858, 2147483648
        %v871 = vor.u32 1.1754944e-38, %v870
        %v872 = vsel %vm869, %v871, %v867
        %v873 = vmul.f32 %v848, %v872
        %v874 = vmin.f32 %v873, 1.0
        %v875 = vmax.f32 %v874, -1.0
        %v876 = vmul.f32 %v493, %v493
        %v877 = vmin.f32 16.0, %v876
        %v878 = vmul.f32 %v877, 2.1237322e-06
        %v879 = vadd.f32 %v878, 0.00028619796
        %v880 = vmul.f32 %v877, %v879
        %v881 = vadd.f32 %v880, 0.0036580483
        %v882 = vmul.f32 %v877, %v881
        %v883 = vadd.f32 %v882, 0.05243302
        %v884 = vmul.f32 %v877, %v883
        %v885 = vadd.f32 %v884, 0.18741608
        %v886 = vmul.f32 %v877, %v885
        %v887 = vadd.f32 %v886, 1.1283791
        %v888 = vmul.f32 %v493, %v887
        %v889 = vmul.f32 %v877, 3.8918573e-05
        %v890 = vadd.f32 %v889, 0.001143296
        %v891 = vmul.f32 %v877, %v890
        %v892 = vadd.f32 %v891, 0.014752088
        %v893 = vmul.f32 %v877, %v892
        %v894 = vadd.f32 %v893, 0.112945676
        %v895 = vmul.f32 %v877, %v894
        %v896 = vadd.f32 %v895, 0.4994258
        %v897 = vmul.f32 %v877, %v896
        %v898 = vadd.f32 %v897, 1.0
        %v899 = vrcp.pop %v898
        %v900 = vmul.f32 %v898, %v899
        %v901 = vsub.f32 1.0, %v900
        %v902 = vmul.f32 %v899, %v901
        %v903 = vadd.f32 %v899, %v902
        %vm904 = vweird.f32 %v898
        %vm905 = vweird.f32 %v899
        %vm906 = vmor %vm904, %vm905
        %v907 = vsel %vm906, %v899, %v903
        %v908 = vand.u32 2147483647, %v898
        %vm909 = vcmp.eq.f32.partialorder %v908, 8.507059e+37
        %v910 = vand.u32 %v898, 2147483648
        %v911 = vor.u32 1.1754944e-38, %v910
        %v912 = vsel %vm909, %v911, %v907
        %v913 = vmul.f32 %v888, %v912
        %v914 = vmin.f32 %v913, 1.0
        %v915 = vmax.f32 %v914, -1.0
        %v916 = vmul.f32 %v494, %v494
        %v917 = vmin.f32 16.0, %v916
        %v918 = vmul.f32 %v917, 2.1237322e-06
        %v919 = vadd.f32 %v918, 0.00028619796
        %v920 = vmul.f32 %v917, %v919
        %v921 = vadd.f32 %v920, 0.0036580483
        %v922 = vmul.f32 %v917, %v921
        %v923 = vadd.f32 %v922, 0.05243302
        %v924 = vmul.f32 %v917, %v923
        %v925 = vadd.f32 %v924, 0.18741608
        %v926 = vmul.f32 %v917, %v925
        %v927 = vadd.f32 %v926, 1.1283791
        %v928 = vmul.f32 %v494, %v927
        %v929 = vmul.f32 %v917, 3.8918573e-05
        %v930 = vadd.f32 %v929, 0.001143296
        %v931 = vmul.f32 %v917, %v930
        %v932 = vadd.f32 %v931, 0.014752088
        %v933 = vmul.f32 %v917, %v932
        %v934 = vadd.f32 %v933, 0.112945676
        %v935 = vmul.f32 %v917, %v934
        %v936 = vadd.f32 %v935, 0.4994258
        %v937 = vmul.f32 %v917, %v936
        %v938 = vadd.f32 %v937, 1.0
        %v939 = vrcp.pop %v938
        %v940 = vmul.f32 %v938, %v939
        %v941 = vsub.f32 1.0, %v940
        %v942 = vmul.f32 %v939, %v941
        %v943 = vadd.f32 %v939, %v942
        %vm944 = vweird.f32 %v938
        %vm945 = vweird.f32 %v939
        %vm946 = vmor %vm944, %vm945
        %v947 = vsel %vm946, %v939, %v943
        %v948 = vand.u32 2147483647, %v938
        %vm949 = vcmp.eq.f32.partialorder %v948, 8.507059e+37
        %v950 = vand.u32 %v938, 2147483648
        %v951 = vor.u32 1.1754944e-38, %v950
        %v952 = vsel %vm949, %v951, %v947
        %v953 = vmul.f32 %v928, %v952
        %v954 = vmin.f32 %v953, 1.0
        %v955 = vmax.f32 %v954, -1.0
        %v956 = vmul.f32 %v495, %v495
        %v957 = vmin.f32 16.0, %v956
        %v958 = vmul.f32 %v957, 2.1237322e-06
        %v959 = vadd.f32 %v958, 0.00028619796
        %v960 = vmul.f32 %v957, %v959
        %v961 = vadd.f32 %v960, 0.0036580483
        %v962 = vmul.f32 %v957, %v961
        %v963 = vadd.f32 %v962, 0.05243302
        %v964 = vmul.f32 %v957, %v963
        %v965 = vadd.f32 %v964, 0.18741608
        %v966 = vmul.f32 %v957, %v965
        %v967 = vadd.f32 %v966, 1.1283791
        %v968 = vmul.f32 %v495, %v967
        %v969 = vmul.f32 %v957, 3.8918573e-05
        %v970 = vadd.f32 %v969, 0.001143296
        %v971 = vmul.f32 %v957, %v970
        %v972 = vadd.f32 %v971, 0.014752088
        %v973 = vmul.f32 %v957, %v972
        %v974 = vadd.f32 %v973, 0.112945676
        %v975 = vmul.f32 %v957, %v974
        %v976 = vadd.f32 %v975, 0.4994258
        %v977 = vmul.f32 %v957, %v976
        %v978 = vadd.f32 %v977, 1.0
        %v979 = vrcp.pop %v978
        %v980 = vmul.f32 %v978, %v979
        %v981 = vsub.f32 1.0, %v980
        %v982 = vmul.f32 %v979, %v981
        %v983 = vadd.f32 %v979, %v982
        %vm984 = vweird.f32 %v978
        %vm985 = vweird.f32 %v979
        %vm986 = vmor %vm984, %vm985
        %v987 = vsel %vm986, %v979, %v983
        %v988 = vand.u32 2147483647, %v978
        %vm989 = vcmp.eq.f32.partialorder %v988, 8.507059e+37
        %v990 = vand.u32 %v978, 2147483648
        %v991 = vor.u32 1.1754944e-38, %v990
        %v992 = vsel %vm989, %v991, %v987
        %v993 = vmul.f32 %v968, %v992
        %v994 = vmin.f32 %v993, 1.0
        %v995 = vmax.f32 %v994, -1.0
        %v996 = vmul.f32 %v496, %v496
        %v997 = vmin.f32 16.0, %v996
        %v998 = vmul.f32 %v997, 2.1237322e-06
        %v999 = vadd.f32 %v998, 0.00028619796
        %v1000 = vmul.f32 %v997, %v999
        %v1001 = vadd.f32 %v1000, 0.0036580483
        %v1002 = vmul.f32 %v997, %v1001
        %v1003 = vadd.f32 %v1002, 0.05243302
        %v1004 = vmul.f32 %v997, %v1003
        %v1005 = vadd.f32 %v1004, 0.18741608
        %v1006 = vmul.f32 %v997, %v1005
        %v1007 = vadd.f32 %v1006, 1.1283791
        %v1008 = vmul.f32 %v496, %v1007
        %v1009 = vmul.f32 %v997, 3.8918573e-05
        %v1010 = vadd.f32 %v1009, 0.001143296
        %v1011 = vmul.f32 %v997, %v1010
        %v1012 = vadd.f32 %v1011, 0.014752088
        %v1013 = vmul.f32 %v997, %v1012
        %v1014 = vadd.f32 %v1013, 0.112945676
        %v1015 = vmul.f32 %v997, %v1014
        %v1016 = vadd.f32 %v1015, 0.4994258
        %v1017 = vmul.f32 %v997, %v1016
        %v1018 = vadd.f32 %v1017, 1.0
        %v1019 = vrcp.pop %v1018
        %v1020 = vmul.f32 %v1018, %v1019
        %v1021 = vsub.f32 1.0, %v1020
        %v1022 = vmul.f32 %v1019, %v1021
        %v1023 = vadd.f32 %v1019, %v1022
        %vm1024 = vweird.f32 %v1018
        %vm1025 = vweird.f32 %v1019
        %vm1026 = vmor %vm1024, %vm1025
        %v1027 = vsel %vm1026, %v1019, %v1023
        %v1028 = vand.u32 2147483647, %v1018
        %vm1029 = vcmp.eq.f32.partialorder %v1028, 8.507059e+37
        %v1030 = vand.u32 %v1018, 2147483648
        %v1031 = vor.u32 1.1754944e-38, %v1030
        %v1032 = vsel %vm1029, %v1031, %v1027
        %v1033 = vmul.f32 %v1008, %v1032
        %v1034 = vmin.f32 %v1033, 1.0
        %v1035 = vmax.f32 %v1034, -1.0
        %v1036 = vmul.f32 %v497, %v497
        %v1037 = vmin.f32 16.0, %v1036
        %v1038 = vmul.f32 %v1037, 2.1237322e-06
        %v1039 = vadd.f32 %v1038, 0.00028619796
        %v1040 = vmul.f32 %v1037, %v1039
        %v1041 = vadd.f32 %v1040, 0.0036580483
        %v1042 = vmul.f32 %v1037, %v1041
        %v1043 = vadd.f32 %v1042, 0.05243302
        %v1044 = vmul.f32 %v1037, %v1043
        %v1045 = vadd.f32 %v1044, 0.18741608
        %v1046 = vmul.f32 %v1037, %v1045
        %v1047 = vadd.f32 %v1046, 1.1283791
        %v1048 = vmul.f32 %v497, %v1047
        %v1049 = vmul.f32 %v1037, 3.8918573e-05
        %v1050 = vadd.f32 %v1049, 0.001143296
        %v1051 = vmul.f32 %v1037, %v1050
        %v1052 = vadd.f32 %v1051, 0.014752088
        %v1053 = vmul.f32 %v1037, %v1052
        %v1054 = vadd.f32 %v1053, 0.112945676
        %v1055 = vmul.f32 %v1037, %v1054
        %v1056 = vadd.f32 %v1055, 0.4994258
        %v1057 = vmul.f32 %v1037, %v1056
        %v1058 = vadd.f32 %v1057, 1.0
        %v1059 = vrcp.pop %v1058
        %v1060 = vmul.f32 %v1058, %v1059
        %v1061 = vsub.f32 1.0, %v1060
        %v1062 = vmul.f32 %v1059, %v1061
        %v1063 = vadd.f32 %v1059, %v1062
        %vm1064 = vweird.f32 %v1058
        %vm1065 = vweird.f32 %v1059
        %vm1066 = vmor %vm1064, %vm1065
        %v1067 = vsel %vm1066, %v1059, %v1063
        %v1068 = vand.u32 2147483647, %v1058
        %vm1069 = vcmp.eq.f32.partialorder %v1068, 8.507059e+37
        %v1070 = vand.u32 %v1058, 2147483648
        %v1071 = vor.u32 1.1754944e-38, %v1070
        %v1072 = vsel %vm1069, %v1071, %v1067
        %v1073 = vmul.f32 %v1048, %v1072
        %v1074 = vmin.f32 %v1073, 1.0
        %v1075 = vmax.f32 %v1074, -1.0
        %v1076 = vmul.f32 %v498, %v498
        %v1077 = vmin.f32 16.0, %v1076
        %v1078 = vmul.f32 %v1077, 2.1237322e-06
        %v1079 = vadd.f32 %v1078, 0.00028619796
        %v1080 = vmul.f32 %v1077, %v1079
        %v1081 = vadd.f32 %v1080, 0.0036580483
        %v1082 = vmul.f32 %v1077, %v1081
        %v1083 = vadd.f32 %v1082, 0.05243302
        %v1084 = vmul.f32 %v1077, %v1083
        %v1085 = vadd.f32 %v1084, 0.18741608
        %v1086 = vmul.f32 %v1077, %v1085
        %v1087 = vadd.f32 %v1086, 1.1283791
        %v1088 = vmul.f32 %v498, %v1087
        %v1089 = vmul.f32 %v1077, 3.8918573e-05
        %v1090 = vadd.f32 %v1089, 0.001143296
        %v1091 = vmul.f32 %v1077, %v1090
        %v1092 = vadd.f32 %v1091, 0.014752088
        %v1093 = vmul.f32 %v1077, %v1092
        %v1094 = vadd.f32 %v1093, 0.112945676
        %v1095 = vmul.f32 %v1077, %v1094
        %v1096 = vadd.f32 %v1095, 0.4994258
        %v1097 = vmul.f32 %v1077, %v1096
        %v1098 = vadd.f32 %v1097, 1.0
        %v1099 = vrcp.pop %v1098
        %v1100 = vmul.f32 %v1098, %v1099
        %v1101 = vsub.f32 1.0, %v1100
        %v1102 = vmul.f32 %v1099, %v1101
        %v1103 = vadd.f32 %v1099, %v1102
        %vm1104 = vweird.f32 %v1098
        %vm1105 = vweird.f32 %v1099
        %vm1106 = vmor %vm1104, %vm1105
        %v1107 = vsel %vm1106, %v1099, %v1103
        %v1108 = vand.u32 2147483647, %v1098
        %vm1109 = vcmp.eq.f32.partialorder %v1108, 8.507059e+37
        %v1110 = vand.u32 %v1098, 2147483648
        %v1111 = vor.u32 1.1754944e-38, %v1110
        %v1112 = vsel %vm1109, %v1111, %v1107
        %v1113 = vmul.f32 %v1088, %v1112
        %v1114 = vmin.f32 %v1113, 1.0
        %v1115 = vmax.f32 %v1114, -1.0
        %v1116 = vmul.f32 %v499, %v499
        %v1117 = vmin.f32 16.0, %v1116
        %v1118 = vmul.f32 %v1117, 2.1237322e-06
        %v1119 = vadd.f32 %v1118, 0.00028619796
        %v1120 = vmul.f32 %v1117, %v1119
        %v1121 = vadd.f32 %v1120, 0.0036580483
        %v1122 = vmul.f32 %v1117, %v1121
        %v1123 = vadd.f32 %v1122, 0.05243302
        %v1124 = vmul.f32 %v1117, %v1123
        %v1125 = vadd.f32 %v1124, 0.18741608
        %v1126 = vmul.f32 %v1117, %v1125
        %v1127 = vadd.f32 %v1126, 1.1283791
        %v1128 = vmul.f32 %v499, %v1127
        %v1129 = vmul.f32 %v1117, 3.8918573e-05
        %v1130 = vadd.f32 %v1129, 0.001143296
        %v1131 = vmul.f32 %v1117, %v1130
        %v1132 = vadd.f32 %v1131, 0.014752088
        %v1133 = vmul.f32 %v1117, %v1132
        %v1134 = vadd.f32 %v1133, 0.112945676
        %v1135 = vmul.f32 %v1117, %v1134
        %v1136 = vadd.f32 %v1135, 0.4994258
        %v1137 = vmul.f32 %v1117, %v1136
        %v1138 = vadd.f32 %v1137, 1.0
        %v1139 = vrcp.pop %v1138
        %v1140 = vmul.f32 %v1138, %v1139
        %v1141 = vsub.f32 1.0, %v1140
        %v1142 = vmul.f32 %v1139, %v1141
        %v1143 = vadd.f32 %v1139, %v1142
        %vm1144 = vweird.f32 %v1138
        %vm1145 = vweird.f32 %v1139
        %vm1146 = vmor %vm1144, %vm1145
        %v1147 = vsel %vm1146, %v1139, %v1143
        %v1148 = vand.u32 2147483647, %v1138
        %vm1149 = vcmp.eq.f32.partialorder %v1148, 8.507059e+37
        %v1150 = vand.u32 %v1138, 2147483648
        %v1151 = vor.u32 1.1754944e-38, %v1150
        %v1152 = vsel %vm1149, %v1151, %v1147
        %v1153 = vmul.f32 %v1128, %v1152
        %v1154 = vmin.f32 %v1153, 1.0
        %v1155 = vmax.f32 %v1154, -1.0
        %v1156 = vmul.f32 %v500, %v500
        %v1157 = vmin.f32 16.0, %v1156
        %v1158 = vmul.f32 %v1157, 2.1237322e-06
        %v1159 = vadd.f32 %v1158, 0.00028619796
        %v1160 = vmul.f32 %v1157, %v1159
        %v1161 = vadd.f32 %v1160, 0.0036580483
        %v1162 = vmul.f32 %v1157, %v1161
        %v1163 = vadd.f32 %v1162, 0.05243302
        %v1164 = vmul.f32 %v1157, %v1163
        %v1165 = vadd.f32 %v1164, 0.18741608
        %v1166 = vmul.f32 %v1157, %v1165
        %v1167 = vadd.f32 %v1166, 1.1283791
        %v1168 = vmul.f32 %v500, %v1167
        %v1169 = vmul.f32 %v1157, 3.8918573e-05
        %v1170 = vadd.f32 %v1169, 0.001143296
        %v1171 = vmul.f32 %v1157, %v1170
        %v1172 = vadd.f32 %v1171, 0.014752088
        %v1173 = vmul.f32 %v1157, %v1172
        %v1174 = vadd.f32 %v1173, 0.112945676
        %v1175 = vmul.f32 %v1157, %v1174
        %v1176 = vadd.f32 %v1175, 0.4994258
        %v1177 = vmul.f32 %v1157, %v1176
        %v1178 = vadd.f32 %v1177, 1.0
        %v1179 = vrcp.pop %v1178
        %v1180 = vmul.f32 %v1178, %v1179
        %v1181 = vsub.f32 1.0, %v1180
        %v1182 = vmul.f32 %v1179, %v1181
        %v1183 = vadd.f32 %v1179, %v1182
        %vm1184 = vweird.f32 %v1178
        %vm1185 = vweird.f32 %v1179
        %vm1186 = vmor %vm1184, %vm1185
        %v1187 = vsel %vm1186, %v1179, %v1183
        %v1188 = vand.u32 2147483647, %v1178
        %vm1189 = vcmp.eq.f32.partialorder %v1188, 8.507059e+37
        %v1190 = vand.u32 %v1178, 2147483648
        %v1191 = vor.u32 1.1754944e-38, %v1190
        %v1192 = vsel %vm1189, %v1191, %v1187
        %v1193 = vmul.f32 %v1168, %v1192
        %v1194 = vmin.f32 %v1193, 1.0
        %v1195 = vmax.f32 %v1194, -1.0
        %v1196 = vmul.f32 %v501, %v501
        %v1197 = vmin.f32 16.0, %v1196
        %v1198 = vmul.f32 %v1197, 2.1237322e-06
        %v1199 = vadd.f32 %v1198, 0.00028619796
        %v1200 = vmul.f32 %v1197, %v1199
        %v1201 = vadd.f32 %v1200, 0.0036580483
        %v1202 = vmul.f32 %v1197, %v1201
        %v1203 = vadd.f32 %v1202, 0.05243302
        %v1204 = vmul.f32 %v1197, %v1203
        %v1205 = vadd.f32 %v1204, 0.18741608
        %v1206 = vmul.f32 %v1197, %v1205
        %v1207 = vadd.f32 %v1206, 1.1283791
        %v1208 = vmul.f32 %v501, %v1207
        %v1209 = vmul.f32 %v1197, 3.8918573e-05
        %v1210 = vadd.f32 %v1209, 0.001143296
        %v1211 = vmul.f32 %v1197, %v1210
        %v1212 = vadd.f32 %v1211, 0.014752088
        %v1213 = vmul.f32 %v1197, %v1212
        %v1214 = vadd.f32 %v1213, 0.112945676
        %v1215 = vmul.f32 %v1197, %v1214
        %v1216 = vadd.f32 %v1215, 0.4994258
        %v1217 = vmul.f32 %v1197, %v1216
        %v1218 = vadd.f32 %v1217, 1.0
        %v1219 = vrcp.pop %v1218
        %v1220 = vmul.f32 %v1218, %v1219
        %v1221 = vsub.f32 1.0, %v1220
        %v1222 = vmul.f32 %v1219, %v1221
        %v1223 = vadd.f32 %v1219, %v1222
        %vm1224 = vweird.f32 %v1218
        %vm1225 = vweird.f32 %v1219
        %vm1226 = vmor %vm1224, %vm1225
        %v1227 = vsel %vm1226, %v1219, %v1223
        %v1228 = vand.u32 2147483647, %v1218
        %vm1229 = vcmp.eq.f32.partialorder %v1228, 8.507059e+37
        %v1230 = vand.u32 %v1218, 2147483648
        %v1231 = vor.u32 1.1754944e-38, %v1230
        %v1232 = vsel %vm1229, %v1231, %v1227
        %v1233 = vmul.f32 %v1208, %v1232
        %v1234 = vmin.f32 %v1233, 1.0
        %v1235 = vmax.f32 %v1234, -1.0
        %v1236 = vmul.f32 %v502, %v502
        %v1237 = vmin.f32 16.0, %v1236
        %v1238 = vmul.f32 %v1237, 2.1237322e-06
        %v1239 = vadd.f32 %v1238, 0.00028619796
        %v1240 = vmul.f32 %v1237, %v1239
        %v1241 = vadd.f32 %v1240, 0.0036580483
        %v1242 = vmul.f32 %v1237, %v1241
        %v1243 = vadd.f32 %v1242, 0.05243302
        %v1244 = vmul.f32 %v1237, %v1243
        %v1245 = vadd.f32 %v1244, 0.18741608
        %v1246 = vmul.f32 %v1237, %v1245
        %v1247 = vadd.f32 %v1246, 1.1283791
        %v1248 = vmul.f32 %v502, %v1247
        %v1249 = vmul.f32 %v1237, 3.8918573e-05
        %v1250 = vadd.f32 %v1249, 0.001143296
        %v1251 = vmul.f32 %v1237, %v1250
        %v1252 = vadd.f32 %v1251, 0.014752088
        %v1253 = vmul.f32 %v1237, %v1252
        %v1254 = vadd.f32 %v1253, 0.112945676
        %v1255 = vmul.f32 %v1237, %v1254
        %v1256 = vadd.f32 %v1255, 0.4994258
        %v1257 = vmul.f32 %v1237, %v1256
        %v1258 = vadd.f32 %v1257, 1.0
        %v1259 = vrcp.pop %v1258
        %v1260 = vmul.f32 %v1258, %v1259
        %v1261 = vsub.f32 1.0, %v1260
        %v1262 = vmul.f32 %v1259, %v1261
        %v1263 = vadd.f32 %v1259, %v1262
        %vm1264 = vweird.f32 %v1258
        %vm1265 = vweird.f32 %v1259
        %vm1266 = vmor %vm1264, %vm1265
        %v1267 = vsel %vm1266, %v1259, %v1263
        %v1268 = vand.u32 2147483647, %v1258
        %vm1269 = vcmp.eq.f32.partialorder %v1268, 8.507059e+37
        %v1270 = vand.u32 %v1258, 2147483648
        %v1271 = vor.u32 1.1754944e-38, %v1270
        %v1272 = vsel %vm1269, %v1271, %v1267
        %v1273 = vmul.f32 %v1248, %v1272
        %v1274 = vmin.f32 %v1273, 1.0
        %v1275 = vmax.f32 %v1274, -1.0
        %v1276 = vmul.f32 %v503, %v503
        %v1277 = vmin.f32 16.0, %v1276
        %v1278 = vmul.f32 %v1277, 2.1237322e-06
        %v1279 = vadd.f32 %v1278, 0.00028619796
        %v1280 = vmul.f32 %v1277, %v1279
        %v1281 = vadd.f32 %v1280, 0.0036580483
        %v1282 = vmul.f32 %v1277, %v1281
        %v1283 = vadd.f32 %v1282, 0.05243302
        %v1284 = vmul.f32 %v1277, %v1283
        %v1285 = vadd.f32 %v1284, 0.18741608
        %v1286 = vmul.f32 %v1277, %v1285
        %v1287 = vadd.f32 %v1286, 1.1283791
        %v1288 = vmul.f32 %v503, %v1287
        %v1289 = vmul.f32 %v1277, 3.8918573e-05
        %v1290 = vadd.f32 %v1289, 0.001143296
        %v1291 = vmul.f32 %v1277, %v1290
        %v1292 = vadd.f32 %v1291, 0.014752088
        %v1293 = vmul.f32 %v1277, %v1292
        %v1294 = vadd.f32 %v1293, 0.112945676
        %v1295 = vmul.f32 %v1277, %v1294
        %v1296 = vadd.f32 %v1295, 0.4994258
        %v1297 = vmul.f32 %v1277, %v1296
        %v1298 = vadd.f32 %v1297, 1.0
        %v1299 = vrcp.pop %v1298
        %v1300 = vmul.f32 %v1298, %v1299
        %v1301 = vsub.f32 1.0, %v1300
        %v1302 = vmul.f32 %v1299, %v1301
        %v1303 = vadd.f32 %v1299, %v1302
        %vm1304 = vweird.f32 %v1298
        %vm1305 = vweird.f32 %v1299
        %vm1306 = vmor %vm1304, %vm1305
        %v1307 = vsel %vm1306, %v1299, %v1303
        %v1308 = vand.u32 2147483647, %v1298
        %vm1309 = vcmp.eq.f32.partialorder %v1308, 8.507059e+37
        %v1310 = vand.u32 %v1298, 2147483648
        %v1311 = vor.u32 1.1754944e-38, %v1310
        %v1312 = vsel %vm1309, %v1311, %v1307
        %v1313 = vmul.f32 %v1288, %v1312
        %v1314 = vmin.f32 %v1313, 1.0
        %v1315 = vmax.f32 %v1314, -1.0
        %v1316 = vmul.f32 %v504, %v504
        %v1317 = vmin.f32 16.0, %v1316
        %v1318 = vmul.f32 %v1317, 2.1237322e-06
        %v1319 = vadd.f32 %v1318, 0.00028619796
        %v1320 = vmul.f32 %v1317, %v1319
        %v1321 = vadd.f32 %v1320, 0.0036580483
        %v1322 = vmul.f32 %v1317, %v1321
        %v1323 = vadd.f32 %v1322, 0.05243302
        %v1324 = vmul.f32 %v1317, %v1323
        %v1325 = vadd.f32 %v1324, 0.18741608
        %v1326 = vmul.f32 %v1317, %v1325
        %v1327 = vadd.f32 %v1326, 1.1283791
        %v1328 = vmul.f32 %v504, %v1327
        %v1329 = vmul.f32 %v1317, 3.8918573e-05
        %v1330 = vadd.f32 %v1329, 0.001143296
        %v1331 = vmul.f32 %v1317, %v1330
        %v1332 = vadd.f32 %v1331, 0.014752088
        %v1333 = vmul.f32 %v1317, %v1332
        %v1334 = vadd.f32 %v1333, 0.112945676
        %v1335 = vmul.f32 %v1317, %v1334
        %v1336 = vadd.f32 %v1335, 0.4994258
        %v1337 = vmul.f32 %v1317, %v1336
        %v1338 = vadd.f32 %v1337, 1.0
        %v1339 = vrcp.pop %v1338
        %v1340 = vmul.f32 %v1338, %v1339
        %v1341 = vsub.f32 1.0, %v1340
        %v1342 = vmul.f32 %v1339, %v1341
        %v1343 = vadd.f32 %v1339, %v1342
        %vm1344 = vweird.f32 %v1338
        %vm1345 = vweird.f32 %v1339
        %vm1346 = vmor %vm1344, %vm1345
        %v1347 = vsel %vm1346, %v1339, %v1343
        %v1348 = vand.u32 2147483647, %v1338
        %vm1349 = vcmp.eq.f32.partialorder %v1348, 8.507059e+37
        %v1350 = vand.u32 %v1338, 2147483648
        %v1351 = vor.u32 1.1754944e-38, %v1350
        %v1352 = vsel %vm1349, %v1351, %v1347
        %v1353 = vmul.f32 %v1328, %v1352
        %v1354 = vmin.f32 %v1353, 1.0
        %v1355 = vmax.f32 %v1354, -1.0
        %v1356 = vmul.f32 %v505, %v505
        %v1357 = vmin.f32 16.0, %v1356
        %v1358 = vmul.f32 %v1357, 2.1237322e-06
        %v1359 = vadd.f32 %v1358, 0.00028619796
        %v1360 = vmul.f32 %v1357, %v1359
        %v1361 = vadd.f32 %v1360, 0.0036580483
        %v1362 = vmul.f32 %v1357, %v1361
        %v1363 = vadd.f32 %v1362, 0.05243302
        %v1364 = vmul.f32 %v1357, %v1363
        %v1365 = vadd.f32 %v1364, 0.18741608
        %v1366 = vmul.f32 %v1357, %v1365
        %v1367 = vadd.f32 %v1366, 1.1283791
        %v1368 = vmul.f32 %v505, %v1367
        %v1369 = vmul.f32 %v1357, 3.8918573e-05
        %v1370 = vadd.f32 %v1369, 0.001143296
        %v1371 = vmul.f32 %v1357, %v1370
        %v1372 = vadd.f32 %v1371, 0.014752088
        %v1373 = vmul.f32 %v1357, %v1372
        %v1374 = vadd.f32 %v1373, 0.112945676
        %v1375 = vmul.f32 %v1357, %v1374
        %v1376 = vadd.f32 %v1375, 0.4994258
        %v1377 = vmul.f32 %v1357, %v1376
        %v1378 = vadd.f32 %v1377, 1.0
        %v1379 = vrcp.pop %v1378
        %v1380 = vmul.f32 %v1378, %v1379
        %v1381 = vsub.f32 1.0, %v1380
        %v1382 = vmul.f32 %v1379, %v1381
        %v1383 = vadd.f32 %v1379, %v1382
        %vm1384 = vweird.f32 %v1378
        %vm1385 = vweird.f32 %v1379
        %vm1386 = vmor %vm1384, %vm1385
        %v1387 = vsel %vm1386, %v1379, %v1383
        %v1388 = vand.u32 2147483647, %v1378
        %vm1389 = vcmp.eq.f32.partialorder %v1388, 8.507059e+37
        %v1390 = vand.u32 %v1378, 2147483648
        %v1391 = vor.u32 1.1754944e-38, %v1390
        %v1392 = vsel %vm1389, %v1391, %v1387
        %v1393 = vmul.f32 %v1368, %v1392
        %v1394 = vmin.f32 %v1393, 1.0
        %v1395 = vmax.f32 %v1394, -1.0
        %v1396 = vmul.f32 %v506, %v506
        %v1397 = vmin.f32 16.0, %v1396
        %v1398 = vmul.f32 %v1397, 2.1237322e-06
        %v1399 = vadd.f32 %v1398, 0.00028619796
        %v1400 = vmul.f32 %v1397, %v1399
        %v1401 = vadd.f32 %v1400, 0.0036580483
        %v1402 = vmul.f32 %v1397, %v1401
        %v1403 = vadd.f32 %v1402, 0.05243302
        %v1404 = vmul.f32 %v1397, %v1403
        %v1405 = vadd.f32 %v1404, 0.18741608
        %v1406 = vmul.f32 %v1397, %v1405
        %v1407 = vadd.f32 %v1406, 1.1283791
        %v1408 = vmul.f32 %v506, %v1407
        %v1409 = vmul.f32 %v1397, 3.8918573e-05
        %v1410 = vadd.f32 %v1409, 0.001143296
        %v1411 = vmul.f32 %v1397, %v1410
        %v1412 = vadd.f32 %v1411, 0.014752088
        %v1413 = vmul.f32 %v1397, %v1412
        %v1414 = vadd.f32 %v1413, 0.112945676
        %v1415 = vmul.f32 %v1397, %v1414
        %v1416 = vadd.f32 %v1415, 0.4994258
        %v1417 = vmul.f32 %v1397, %v1416
        %v1418 = vadd.f32 %v1417, 1.0
        %v1419 = vrcp.pop %v1418
        %v1420 = vmul.f32 %v1418, %v1419
        %v1421 = vsub.f32 1.0, %v1420
        %v1422 = vmul.f32 %v1419, %v1421
        %v1423 = vadd.f32 %v1419, %v1422
        %vm1424 = vweird.f32 %v1418
        %vm1425 = vweird.f32 %v1419
        %vm1426 = vmor %vm1424, %vm1425
        %v1427 = vsel %vm1426, %v1419, %v1423
        %v1428 = vand.u32 2147483647, %v1418
        %vm1429 = vcmp.eq.f32.partialorder %v1428, 8.507059e+37
        %v1430 = vand.u32 %v1418, 2147483648
        %v1431 = vor.u32 1.1754944e-38, %v1430
        %v1432 = vsel %vm1429, %v1431, %v1427
        %v1433 = vmul.f32 %v1408, %v1432
        %v1434 = vmin.f32 %v1433, 1.0
        %v1435 = vmax.f32 %v1434, -1.0
        %v1436 = vmul.f32 %v507, %v507
        %v1437 = vmin.f32 16.0, %v1436
        %v1438 = vmul.f32 %v1437, 2.1237322e-06
        %v1439 = vadd.f32 %v1438, 0.00028619796
        %v1440 = vmul.f32 %v1437, %v1439
        %v1441 = vadd.f32 %v1440, 0.0036580483
        %v1442 = vmul.f32 %v1437, %v1441
        %v1443 = vadd.f32 %v1442, 0.05243302
        %v1444 = vmul.f32 %v1437, %v1443
        %v1445 = vadd.f32 %v1444, 0.18741608
        %v1446 = vmul.f32 %v1437, %v1445
        %v1447 = vadd.f32 %v1446, 1.1283791
        %v1448 = vmul.f32 %v507, %v1447
        %v1449 = vmul.f32 %v1437, 3.8918573e-05
        %v1450 = vadd.f32 %v1449, 0.001143296
        %v1451 = vmul.f32 %v1437, %v1450
        %v1452 = vadd.f32 %v1451, 0.014752088
        %v1453 = vmul.f32 %v1437, %v1452
        %v1454 = vadd.f32 %v1453, 0.112945676
        %v1455 = vmul.f32 %v1437, %v1454
        %v1456 = vadd.f32 %v1455, 0.4994258
        %v1457 = vmul.f32 %v1437, %v1456
        %v1458 = vadd.f32 %v1457, 1.0
        %v1459 = vrcp.pop %v1458
        %v1460 = vmul.f32 %v1458, %v1459
        %v1461 = vsub.f32 1.0, %v1460
        %v1462 = vmul.f32 %v1459, %v1461
        %v1463 = vadd.f32 %v1459, %v1462
        %vm1464 = vweird.f32 %v1458
        %vm1465 = vweird.f32 %v1459
        %vm1466 = vmor %vm1464, %vm1465
        %v1467 = vsel %vm1466, %v1459, %v1463
        %v1468 = vand.u32 2147483647, %v1458
        %vm1469 = vcmp.eq.f32.partialorder %v1468, 8.507059e+37
        %v1470 = vand.u32 %v1458, 2147483648
        %v1471 = vor.u32 1.1754944e-38, %v1470
        %v1472 = vsel %vm1469, %v1471, %v1467
        %v1473 = vmul.f32 %v1448, %v1472
        %v1474 = vmin.f32 %v1473, 1.0
        %v1475 = vmax.f32 %v1474, -1.0
        %v1476 = vmul.f32 %v508, %v508
        %v1477 = vmin.f32 16.0, %v1476
        %v1478 = vmul.f32 %v1477, 2.1237322e-06
        %v1479 = vadd.f32 %v1478, 0.00028619796
        %v1480 = vmul.f32 %v1477, %v1479
        %v1481 = vadd.f32 %v1480, 0.0036580483
        %v1482 = vmul.f32 %v1477, %v1481
        %v1483 = vadd.f32 %v1482, 0.05243302
        %v1484 = vmul.f32 %v1477, %v1483
        %v1485 = vadd.f32 %v1484, 0.18741608
        %v1486 = vmul.f32 %v1477, %v1485
        %v1487 = vadd.f32 %v1486, 1.1283791
        %v1488 = vmul.f32 %v508, %v1487
        %v1489 = vmul.f32 %v1477, 3.8918573e-05
        %v1490 = vadd.f32 %v1489, 0.001143296
        %v1491 = vmul.f32 %v1477, %v1490
        %v1492 = vadd.f32 %v1491, 0.014752088
        %v1493 = vmul.f32 %v1477, %v1492
        %v1494 = vadd.f32 %v1493, 0.112945676
        %v1495 = vmul.f32 %v1477, %v1494
        %v1496 = vadd.f32 %v1495, 0.4994258
        %v1497 = vmul.f32 %v1477, %v1496
        %v1498 = vadd.f32 %v1497, 1.0
        %v1499 = vrcp.pop %v1498
        %v1500 = vmul.f32 %v1498, %v1499
        %v1501 = vsub.f32 1.0, %v1500
        %v1502 = vmul.f32 %v1499, %v1501
        %v1503 = vadd.f32 %v1499, %v1502
        %vm1504 = vweird.f32 %v1498
        %vm1505 = vweird.f32 %v1499
        %vm1506 = vmor %vm1504, %vm1505
        %v1507 = vsel %vm1506, %v1499, %v1503
        %v1508 = vand.u32 2147483647, %v1498
        %vm1509 = vcmp.eq.f32.partialorder %v1508, 8.507059e+37
        %v1510 = vand.u32 %v1498, 2147483648
        %v1511 = vor.u32 1.1754944e-38, %v1510
        %v1512 = vsel %vm1509, %v1511, %v1507
        %v1513 = vmul.f32 %v1488, %v1512
        %v1514 = vmin.f32 %v1513, 1.0
        %v1515 = vmax.f32 %v1514, -1.0
        %v1516 = vmul.f32 %v509, %v509
        %v1517 = vmin.f32 16.0, %v1516
        %v1518 = vmul.f32 %v1517, 2.1237322e-06
        %v1519 = vadd.f32 %v1518, 0.00028619796
        %v1520 = vmul.f32 %v1517, %v1519
        %v1521 = vadd.f32 %v1520, 0.0036580483
        %v1522 = vmul.f32 %v1517, %v1521
        %v1523 = vadd.f32 %v1522, 0.05243302
        %v1524 = vmul.f32 %v1517, %v1523
        %v1525 = vadd.f32 %v1524, 0.18741608
        %v1526 = vmul.f32 %v1517, %v1525
        %v1527 = vadd.f32 %v1526, 1.1283791
        %v1528 = vmul.f32 %v509, %v1527
        %v1529 = vmul.f32 %v1517, 3.8918573e-05
        %v1530 = vadd.f32 %v1529, 0.001143296
        %v1531 = vmul.f32 %v1517, %v1530
        %v1532 = vadd.f32 %v1531, 0.014752088
        %v1533 = vmul.f32 %v1517, %v1532
        %v1534 = vadd.f32 %v1533, 0.112945676
        %v1535 = vmul.f32 %v1517, %v1534
        %v1536 = vadd.f32 %v1535, 0.4994258
        %v1537 = vmul.f32 %v1517, %v1536
        %v1538 = vadd.f32 %v1537, 1.0
        %v1539 = vrcp.pop %v1538
        %v1540 = vmul.f32 %v1538, %v1539
        %v1541 = vsub.f32 1.0, %v1540
        %v1542 = vmul.f32 %v1539, %v1541
        %v1543 = vadd.f32 %v1539, %v1542
        %vm1544 = vweird.f32 %v1538
        %vm1545 = vweird.f32 %v1539
        %vm1546 = vmor %vm1544, %vm1545
        %v1547 = vsel %vm1546, %v1539, %v1543
        %v1548 = vand.u32 2147483647, %v1538
        %vm1549 = vcmp.eq.f32.partialorder %v1548, 8.507059e+37
        %v1550 = vand.u32 %v1538, 2147483648
        %v1551 = vor.u32 1.1754944e-38, %v1550
        %v1552 = vsel %vm1549, %v1551, %v1547
        %v1553 = vmul.f32 %v1528, %v1552
        %v1554 = vmin.f32 %v1553, 1.0
        %v1555 = vmax.f32 %v1554, -1.0
        %v1556 = vmul.f32 %v510, %v510
        %v1557 = vmin.f32 16.0, %v1556
        %v1558 = vmul.f32 %v1557, 2.1237322e-06
        %v1559 = vadd.f32 %v1558, 0.00028619796
        %v1560 = vmul.f32 %v1557, %v1559
        %v1561 = vadd.f32 %v1560, 0.0036580483
        %v1562 = vmul.f32 %v1557, %v1561
        %v1563 = vadd.f32 %v1562, 0.05243302
        %v1564 = vmul.f32 %v1557, %v1563
        %v1565 = vadd.f32 %v1564, 0.18741608
        %v1566 = vmul.f32 %v1557, %v1565
        %v1567 = vadd.f32 %v1566, 1.1283791
        %v1568 = vmul.f32 %v510, %v1567
        %v1569 = vmul.f32 %v1557, 3.8918573e-05
        %v1570 = vadd.f32 %v1569, 0.001143296
        %v1571 = vmul.f32 %v1557, %v1570
        %v1572 = vadd.f32 %v1571, 0.014752088
        %v1573 = vmul.f32 %v1557, %v1572
        %v1574 = vadd.f32 %v1573, 0.112945676
        %v1575 = vmul.f32 %v1557, %v1574
        %v1576 = vadd.f32 %v1575, 0.4994258
        %v1577 = vmul.f32 %v1557, %v1576
        %v1578 = vadd.f32 %v1577, 1.0
        %v1579 = vrcp.pop %v1578
        %v1580 = vmul.f32 %v1578, %v1579
        %v1581 = vsub.f32 1.0, %v1580
        %v1582 = vmul.f32 %v1579, %v1581
        %v1583 = vadd.f32 %v1579, %v1582
        %vm1584 = vweird.f32 %v1578
        %vm1585 = vweird.f32 %v1579
        %vm1586 = vmor %vm1584, %vm1585
        %v1587 = vsel %vm1586, %v1579, %v1583
        %v1588 = vand.u32 2147483647, %v1578
        %vm1589 = vcmp.eq.f32.partialorder %v1588, 8.507059e+37
        %v1590 = vand.u32 %v1578, 2147483648
        %v1591 = vor.u32 1.1754944e-38, %v1590
        %v1592 = vsel %vm1589, %v1591, %v1587
        %v1593 = vmul.f32 %v1568, %v1592
        %v1594 = vmin.f32 %v1593, 1.0
        %v1595 = vmax.f32 %v1594, -1.0
        %v1596 = vmul.f32 %v511, %v511
        %v1597 = vmin.f32 16.0, %v1596
        %v1598 = vmul.f32 %v1597, 2.1237322e-06
        %v1599 = vadd.f32 %v1598, 0.00028619796
        %v1600 = vmul.f32 %v1597, %v1599
        %v1601 = vadd.f32 %v1600, 0.0036580483
        %v1602 = vmul.f32 %v1597, %v1601
        %v1603 = vadd.f32 %v1602, 0.05243302
        %v1604 = vmul.f32 %v1597, %v1603
        %v1605 = vadd.f32 %v1604, 0.18741608
        %v1606 = vmul.f32 %v1597, %v1605
        %v1607 = vadd.f32 %v1606, 1.1283791
        %v1608 = vmul.f32 %v511, %v1607
        %v1609 = vmul.f32 %v1597, 3.8918573e-05
        %v1610 = vadd.f32 %v1609, 0.001143296
        %v1611 = vmul.f32 %v1597, %v1610
        %v1612 = vadd.f32 %v1611, 0.014752088
        %v1613 = vmul.f32 %v1597, %v1612
        %v1614 = vadd.f32 %v1613, 0.112945676
        %v1615 = vmul.f32 %v1597, %v1614
        %v1616 = vadd.f32 %v1615, 0.4994258
        %v1617 = vmul.f32 %v1597, %v1616
        %v1618 = vadd.f32 %v1617, 1.0
        %v1619 = vrcp.pop %v1618
        %v1620 = vmul.f32 %v1618, %v1619
        %v1621 = vsub.f32 1.0, %v1620
        %v1622 = vmul.f32 %v1619, %v1621
        %v1623 = vadd.f32 %v1619, %v1622
        %vm1624 = vweird.f32 %v1618
        %vm1625 = vweird.f32 %v1619
        %vm1626 = vmor %vm1624, %vm1625
        %v1627 = vsel %vm1626, %v1619, %v1623
        %v1628 = vand.u32 2147483647, %v1618
        %vm1629 = vcmp.eq.f32.partialorder %v1628, 8.507059e+37
        %v1630 = vand.u32 %v1618, 2147483648
        %v1631 = vor.u32 1.1754944e-38, %v1630
        %v1632 = vsel %vm1629, %v1631, %v1627
        %v1633 = vmul.f32 %v1608, %v1632
        %v1634 = vmin.f32 %v1633, 1.0
        %v1635 = vmax.f32 %v1634, -1.0
        %v1636 = vmul.f32 %v512, %v512
        %v1637 = vmin.f32 16.0, %v1636
        %v1638 = vmul.f32 %v1637, 2.1237322e-06
        %v1639 = vadd.f32 %v1638, 0.00028619796
        %v1640 = vmul.f32 %v1637, %v1639
        %v1641 = vadd.f32 %v1640, 0.0036580483
        %v1642 = vmul.f32 %v1637, %v1641
        %v1643 = vadd.f32 %v1642, 0.05243302
        %v1644 = vmul.f32 %v1637, %v1643
        %v1645 = vadd.f32 %v1644, 0.18741608
        %v1646 = vmul.f32 %v1637, %v1645
        %v1647 = vadd.f32 %v1646, 1.1283791
        %v1648 = vmul.f32 %v512, %v1647
        %v1649 = vmul.f32 %v1637, 3.8918573e-05
        %v1650 = vadd.f32 %v1649, 0.001143296
        %v1651 = vmul.f32 %v1637, %v1650
        %v1652 = vadd.f32 %v1651, 0.014752088
        %v1653 = vmul.f32 %v1637, %v1652
        %v1654 = vadd.f32 %v1653, 0.112945676
        %v1655 = vmul.f32 %v1637, %v1654
        %v1656 = vadd.f32 %v1655, 0.4994258
        %v1657 = vmul.f32 %v1637, %v1656
        %v1658 = vadd.f32 %v1657, 1.0
        %v1659 = vrcp.pop %v1658
        %v1660 = vmul.f32 %v1658, %v1659
        %v1661 = vsub.f32 1.0, %v1660
        %v1662 = vmul.f32 %v1659, %v1661
        %v1663 = vadd.f32 %v1659, %v1662
        %vm1664 = vweird.f32 %v1658
        %vm1665 = vweird.f32 %v1659
        %vm1666 = vmor %vm1664, %vm1665
        %v1667 = vsel %vm1666, %v1659, %v1663
        %v1668 = vand.u32 2147483647, %v1658
        %vm1669 = vcmp.eq.f32.partialorder %v1668, 8.507059e+37
        %v1670 = vand.u32 %v1658, 2147483648
        %v1671 = vor.u32 1.1754944e-38, %v1670
        %v1672 = vsel %vm1669, %v1671, %v1667
        %v1673 = vmul.f32 %v1648, %v1672
        %v1674 = vmin.f32 %v1673, 1.0
        %v1675 = vmax.f32 %v1674, -1.0
        %v1676 = vmul.f32 %v513, %v513
        %v1677 = vmin.f32 16.0, %v1676
        %v1678 = vmul.f32 %v1677, 2.1237322e-06
        %v1679 = vadd.f32 %v1678, 0.00028619796
        %v1680 = vmul.f32 %v1677, %v1679
        %v1681 = vadd.f32 %v1680, 0.0036580483
        %v1682 = vmul.f32 %v1677, %v1681
        %v1683 = vadd.f32 %v1682, 0.05243302
        %v1684 = vmul.f32 %v1677, %v1683
        %v1685 = vadd.f32 %v1684, 0.18741608
        %v1686 = vmul.f32 %v1677, %v1685
        %v1687 = vadd.f32 %v1686, 1.1283791
        %v1688 = vmul.f32 %v513, %v1687
        %v1689 = vmul.f32 %v1677, 3.8918573e-05
        %v1690 = vadd.f32 %v1689, 0.001143296
        %v1691 = vmul.f32 %v1677, %v1690
        %v1692 = vadd.f32 %v1691, 0.014752088
        %v1693 = vmul.f32 %v1677, %v1692
        %v1694 = vadd.f32 %v1693, 0.112945676
        %v1695 = vmul.f32 %v1677, %v1694
        %v1696 = vadd.f32 %v1695, 0.4994258
        %v1697 = vmul.f32 %v1677, %v1696
        %v1698 = vadd.f32 %v1697, 1.0
        %v1699 = vrcp.pop %v1698
        %v1700 = vmul.f32 %v1698, %v1699
        %v1701 = vsub.f32 1.0, %v1700
        %v1702 = vmul.f32 %v1699, %v1701
        %v1703 = vadd.f32 %v1699, %v1702
        %vm1704 = vweird.f32 %v1698
        %vm1705 = vweird.f32 %v1699
        %vm1706 = vmor %vm1704, %vm1705
        %v1707 = vsel %vm1706, %v1699, %v1703
        %v1708 = vand.u32 2147483647, %v1698
        %vm1709 = vcmp.eq.f32.partialorder %v1708, 8.507059e+37
        %v1710 = vand.u32 %v1698, 2147483648
        %v1711 = vor.u32 1.1754944e-38, %v1710
        %v1712 = vsel %vm1709, %v1711, %v1707
        %v1713 = vmul.f32 %v1688, %v1712
        %v1714 = vmin.f32 %v1713, 1.0
        %v1715 = vmax.f32 %v1714, -1.0
        %v1716 = vmul.f32 %v514, %v514
        %v1717 = vmin.f32 16.0, %v1716
        %v1718 = vmul.f32 %v1717, 2.1237322e-06
        %v1719 = vadd.f32 %v1718, 0.00028619796
        %v1720 = vmul.f32 %v1717, %v1719
        %v1721 = vadd.f32 %v1720, 0.0036580483
        %v1722 = vmul.f32 %v1717, %v1721
        %v1723 = vadd.f32 %v1722, 0.05243302
        %v1724 = vmul.f32 %v1717, %v1723
        %v1725 = vadd.f32 %v1724, 0.18741608
        %v1726 = vmul.f32 %v1717, %v1725
        %v1727 = vadd.f32 %v1726, 1.1283791
        %v1728 = vmul.f32 %v514, %v1727
        %v1729 = vmul.f32 %v1717, 3.8918573e-05
        %v1730 = vadd.f32 %v1729, 0.001143296
        %v1731 = vmul.f32 %v1717, %v1730
        %v1732 = vadd.f32 %v1731, 0.014752088
        %v1733 = vmul.f32 %v1717, %v1732
        %v1734 = vadd.f32 %v1733, 0.112945676
        %v1735 = vmul.f32 %v1717, %v1734
        %v1736 = vadd.f32 %v1735, 0.4994258
        %v1737 = vmul.f32 %v1717, %v1736
        %v1738 = vadd.f32 %v1737, 1.0
        %v1739 = vrcp.pop %v1738
        %v1740 = vmul.f32 %v1738, %v1739
        %v1741 = vsub.f32 1.0, %v1740
        %v1742 = vmul.f32 %v1739, %v1741
        %v1743 = vadd.f32 %v1739, %v1742
        %vm1744 = vweird.f32 %v1738
        %vm1745 = vweird.f32 %v1739
        %vm1746 = vmor %vm1744, %vm1745
        %v1747 = vsel %vm1746, %v1739, %v1743
        %v1748 = vand.u32 2147483647, %v1738
        %vm1749 = vcmp.eq.f32.partialorder %v1748, 8.507059e+37
        %v1750 = vand.u32 %v1738, 2147483648
        %v1751 = vor.u32 1.1754944e-38, %v1750
        %v1752 = vsel %vm1749, %v1751, %v1747
        %v1753 = vmul.f32 %v1728, %v1752
        %v1754 = vmin.f32 %v1753, 1.0
        %v1755 = vmax.f32 %v1754, -1.0
        %v1756 = vmul.f32 %v515, %v515
        %v1757 = vmin.f32 16.0, %v1756
        %v1758 = vmul.f32 %v1757, 2.1237322e-06
        %v1759 = vadd.f32 %v1758, 0.00028619796
        %v1760 = vmul.f32 %v1757, %v1759
        %v1761 = vadd.f32 %v1760, 0.0036580483
        %v1762 = vmul.f32 %v1757, %v1761
        %v1763 = vadd.f32 %v1762, 0.05243302
        %v1764 = vmul.f32 %v1757, %v1763
        %v1765 = vadd.f32 %v1764, 0.18741608
        %v1766 = vmul.f32 %v1757, %v1765
        %v1767 = vadd.f32 %v1766, 1.1283791
        %v1768 = vmul.f32 %v515, %v1767
        %v1769 = vmul.f32 %v1757, 3.8918573e-05
        %v1770 = vadd.f32 %v1769, 0.001143296
        %v1771 = vmul.f32 %v1757, %v1770
        %v1772 = vadd.f32 %v1771, 0.014752088
        %v1773 = vmul.f32 %v1757, %v1772
        %v1774 = vadd.f32 %v1773, 0.112945676
        %v1775 = vmul.f32 %v1757, %v1774
        %v1776 = vadd.f32 %v1775, 0.4994258
        %v1777 = vmul.f32 %v1757, %v1776
        %v1778 = vadd.f32 %v1777, 1.0
        %v1779 = vrcp.pop %v1778
        %v1780 = vmul.f32 %v1778, %v1779
        %v1781 = vsub.f32 1.0, %v1780
        %v1782 = vmul.f32 %v1779, %v1781
        %v1783 = vadd.f32 %v1779, %v1782
        %vm1784 = vweird.f32 %v1778
        %vm1785 = vweird.f32 %v1779
        %vm1786 = vmor %vm1784, %vm1785
        %v1787 = vsel %vm1786, %v1779, %v1783
        %v1788 = vand.u32 2147483647, %v1778
        %vm1789 = vcmp.eq.f32.partialorder %v1788, 8.507059e+37
        %v1790 = vand.u32 %v1778, 2147483648
        %v1791 = vor.u32 1.1754944e-38, %v1790
        %v1792 = vsel %vm1789, %v1791, %v1787
        %v1793 = vmul.f32 %v1768, %v1792
        %v1794 = vmin.f32 %v1793, 1.0
        %v1795 = vmax.f32 %v1794, -1.0
        %v1796 = vadd.f32 %v555, 1.0
        %v1797 = vadd.f32 %v595, 1.0
        %v1798 = vadd.f32 %v635, 1.0
        %v1799 = vadd.f32 %v675, 1.0
        %v1800 = vadd.f32 %v715, 1.0
        %v1801 = vadd.f32 %v755, 1.0
        %v1802 = vadd.f32 %v795, 1.0
        %v1803 = vadd.f32 %v835, 1.0
        %v1804 = vadd.f32 %v875, 1.0
        %v1805 = vadd.f32 %v915, 1.0
        %v1806 = vadd.f32 %v955, 1.0
        %v1807 = vadd.f32 %v995, 1.0
        %v1808 = vadd.f32 %v1035, 1.0
        %v1809 = vadd.f32 %v1075, 1.0
        %v1810 = vadd.f32 %v1115, 1.0
        %v1811 = vadd.f32 %v1155, 1.0
        %v1812 = vadd.f32 %v1195, 1.0
        %v1813 = vadd.f32 %v1235, 1.0
        %v1814 = vadd.f32 %v1275, 1.0
        %v1815 = vadd.f32 %v1315, 1.0
        %v1816 = vadd.f32 %v1355, 1.0
        %v1817 = vadd.f32 %v1395, 1.0
        %v1818 = vadd.f32 %v1435, 1.0
        %v1819 = vadd.f32 %v1475, 1.0
        %v1820 = vadd.f32 %v1515, 1.0
        %v1821 = vadd.f32 %v1555, 1.0
        %v1822 = vadd.f32 %v1595, 1.0
        %v1823 = vadd.f32 %v1635, 1.0
        %v1824 = vadd.f32 %v1675, 1.0
        %v1825 = vadd.f32 %v1715, 1.0
        %v1826 = vadd.f32 %v1755, 1.0
        %v1827 = vadd.f32 %v1795, 1.0
        %v1828 = vmul.f32 %v445, %v1796
        %v1829 = vmul.f32 %v446, %v1797
        %v1830 = vmul.f32 %v447, %v1798
        %v1831 = vmul.f32 %v448, %v1799
        %v1832 = vmul.f32 %v449, %v1800
        %v1833 = vmul.f32 %v450, %v1801
        %v1834 = vmul.f32 %v451, %v1802
        %v1835 = vmul.f32 %v452, %v1803
        %v1836 = vmul.f32 %v453, %v1804
        %v1837 = vmul.f32 %v454, %v1805
        %v1838 = vmul.f32 %v455, %v1806
        %v1839 = vmul.f32 %v456, %v1807
        %v1840 = vmul.f32 %v457, %v1808
        %v1841 = vmul.f32 %v458, %v1809
        %v1842 = vmul.f32 %v459, %v1810
        %v1843 = vmul.f32 %v460, %v1811
        %v1844 = vmul.f32 %v461, %v1812
        %v1845 = vmul.f32 %v462, %v1813
        %v1846 = vmul.f32 %v463, %v1814
        %v1847 = vmul.f32 %v464, %v1815
        %v1848 = vmul.f32 %v465, %v1816
        %v1849 = vmul.f32 %v466, %v1817
        %v1850 = vmul.f32 %v467, %v1818
        %v1851 = vmul.f32 %v468, %v1819
        %v1852 = vmul.f32 %v469, %v1820
        %v1853 = vmul.f32 %v470, %v1821
        %v1854 = vmul.f32 %v471, %v1822
        %v1855 = vmul.f32 %v472, %v1823
        %v1856 = vmul.f32 %v473, %v1824
        %v1857 = vmul.f32 %v474, %v1825
        %v1858 = vmul.f32 %v475, %v1826
        %v1859 = vmul.f32 %v476, %v1827
        %v1860 = vld [vmem:[#allocation7] sm:$0xff]
        %v1861 = vld [vmem:[#allocation7 + $0x8] sm:$0xff]
        %v1862 = vld [vmem:[#allocation7 + $0x10] sm:$0xff]
        %v1863 = vld [vmem:[#allocation7 + $0x18] sm:$0xff]
        %v1864 = vld [vmem:[#allocation7 + $0x20] sm:$0xff]
        %v1865 = vld [vmem:[#allocation7 + $0x28] sm:$0xff]
        %v1866 = vld [vmem:[#allocation7 + $0x30] sm:$0xff]
        %v1867 = vld [vmem:[#allocation7 + $0x38] sm:$0xff]
        %v1868 = vld [vmem:[#allocation7 + $0x40] sm:$0xff]
        %v1869 = vld [vmem:[#allocation7 + $0x48] sm:$0xff]
        %v1870 = vld [vmem:[#allocation7 + $0x50] sm:$0xff]
        %v1871 = vld [vmem:[#allocation7 + $0x58] sm:$0xff]
        %v1872 = vld [vmem:[#allocation7 + $0x60] sm:$0xff]
        %v1873 = vld [vmem:[#allocation7 + $0x68] sm:$0xff]
        %v1874 = vld [vmem:[#allocation7 + $0x70] sm:$0xff]
        %v1875 = vld [vmem:[#allocation7 + $0x78] sm:$0xff]
        %v1876 = vld [vmem:[%s4] sm:$0x1]
        %v1878 = vperm.slane %v1876, 0
        %1880 = vmatpush.msra.mxu0 %v1875
        %1881 = vmatpush.msra.mxu0 %v1874
        %1882 = vmatpush.msra.mxu0 %v1873
        %1883 = vmatpush.msra.mxu0 %v1872
        %1884 = vmatpush.msra.mxu0 %v1871
        %1885 = vmatpush.msra.mxu0 %v1870
        %1886 = vmatpush.msra.mxu0 %v1869
        %1887 = vmatpush.msra.mxu0 %v1868
        %1888 = vmatpush.msra.mxu0 %v1867
        %1889 = vmatpush.msra.mxu0 %v1866
        %1890 = vmatpush.msra.mxu0 %v1865
        %1891 = vmatpush.msra.mxu0 %v1864
        %1892 = vmatpush.msra.mxu0 %v1863
        %1893 = vmatpush.msra.mxu0 %v1862
        %1894 = vmatpush.msra.mxu0 %v1861
        %1895 = vmatpush.msra.mxu0 %v1860
        %1896 = vmatmul.f32.gmra.mxu0 %v1828
        %v1897 = vpop.f32.mrf.mxu0
        %v1898 = vadd.f32 %v1878, %v1897
        %1899 = vmatmul.f32.gmra.mxu0 %v1829
        %v1900 = vpop.f32.mrf.mxu0
        %v1901 = vadd.f32 %v1878, %v1900
        %1902 = vmatmul.f32.gmra.mxu0 %v1830
        %v1903 = vpop.f32.mrf.mxu0
        %v1904 = vadd.f32 %v1878, %v1903
        %1905 = vmatmul.f32.gmra.mxu0 %v1831
        %v1906 = vpop.f32.mrf.mxu0
        %v1907 = vadd.f32 %v1878, %v1906
        %1908 = vmatmul.f32.gmra.mxu0 %v1832
        %v1909 = vpop.f32.mrf.mxu0
        %v1910 = vadd.f32 %v1878, %v1909
        %1911 = vmatmul.f32.gmra.mxu0 %v1833
        %v1912 = vpop.f32.mrf.mxu0
        %v1913 = vadd.f32 %v1878, %v1912
        %1914 = vmatmul.f32.gmra.mxu0 %v1834
        %v1915 = vpop.f32.mrf.mxu0
        %v1916 = vadd.f32 %v1878, %v1915
        %1917 = vmatmul.f32.gmra.mxu0 %v1835
        %v1918 = vpop.f32.mrf.mxu0
        %v1919 = vadd.f32 %v1878, %v1918
        %1920 = vmatmul.f32.gmra.mxu0 %v1836
        %v1921 = vpop.f32.mrf.mxu0
        %v1922 = vadd.f32 %v1878, %v1921
        %1923 = vmatmul.f32.gmra.mxu0 %v1837
        %v1924 = vpop.f32.mrf.mxu0
        %v1925 = vadd.f32 %v1878, %v1924
        %1926 = vmatmul.f32.gmra.mxu0 %v1838
        %v1927 = vpop.f32.mrf.mxu0
        %v1928 = vadd.f32 %v1878, %v1927
        %1929 = vmatmul.f32.gmra.mxu0 %v1839
        %v1930 = vpop.f32.mrf.mxu0
        %v1931 = vadd.f32 %v1878, %v1930
        %1932 = vmatmul.f32.gmra.mxu0 %v1840
        %v1933 = vpop.f32.mrf.mxu0
        %v1934 = vadd.f32 %v1878, %v1933
        %1935 = vmatmul.f32.gmra.mxu0 %v1841
        %v1936 = vpop.f32.mrf.mxu0
        %v1937 = vadd.f32 %v1878, %v1936
        %1938 = vmatmul.f32.gmra.mxu0 %v1842
        %v1939 = vpop.f32.mrf.mxu0
        %v1940 = vadd.f32 %v1878, %v1939
        %1941 = vmatmul.f32.gmra.mxu0 %v1843
        %v1942 = vpop.f32.mrf.mxu0
        %v1943 = vadd.f32 %v1878, %v1942
        %1944 = vmatmul.f32.gmra.mxu0 %v1844
        %v1945 = vpop.f32.mrf.mxu0
        %v1946 = vadd.f32 %v1878, %v1945
        %1947 = vmatmul.f32.gmra.mxu0 %v1845
        %v1948 = vpop.f32.mrf.mxu0
        %v1949 = vadd.f32 %v1878, %v1948
        %1950 = vmatmul.f32.gmra.mxu0 %v1846
        %v1951 = vpop.f32.mrf.mxu0
        %v1952 = vadd.f32 %v1878, %v1951
        %1953 = vmatmul.f32.gmra.mxu0 %v1847
        %v1954 = vpop.f32.mrf.mxu0
        %v1955 = vadd.f32 %v1878, %v1954
        %1956 = vmatmul.f32.gmra.mxu0 %v1848
        %v1957 = vpop.f32.mrf.mxu0
        %v1958 = vadd.f32 %v1878, %v1957
        %1959 = vmatmul.f32.gmra.mxu0 %v1849
        %v1960 = vpop.f32.mrf.mxu0
        %v1961 = vadd.f32 %v1878, %v1960
        %1962 = vmatmul.f32.gmra.mxu0 %v1850
        %v1963 = vpop.f32.mrf.mxu0
        %v1964 = vadd.f32 %v1878, %v1963
        %1965 = vmatmul.f32.gmra.mxu0 %v1851
        %v1966 = vpop.f32.mrf.mxu0
        %v1967 = vadd.f32 %v1878, %v1966
        %1968 = vmatmul.f32.gmra.mxu0 %v1852
        %v1969 = vpop.f32.mrf.mxu0
        %v1970 = vadd.f32 %v1878, %v1969
        %1971 = vmatmul.f32.gmra.mxu0 %v1853
        %v1972 = vpop.f32.mrf.mxu0
        %v1973 = vadd.f32 %v1878, %v1972
        %1974 = vmatmul.f32.gmra.mxu0 %v1854
        %v1975 = vpop.f32.mrf.mxu0
        %v1976 = vadd.f32 %v1878, %v1975
        %1977 = vmatmul.f32.gmra.mxu0 %v1855
        %v1978 = vpop.f32.mrf.mxu0
        %v1979 = vadd.f32 %v1878, %v1978
        %1980 = vmatmul.f32.gmra.mxu0 %v1856
        %v1981 = vpop.f32.mrf.mxu0
        %v1982 = vadd.f32 %v1878, %v1981
        %1983 = vmatmul.f32.gmra.mxu0 %v1857
        %v1984 = vpop.f32.mrf.mxu0
        %v1985 = vadd.f32 %v1878, %v1984
        %1986 = vmatmul.f32.gmra.mxu0 %v1858
        %v1987 = vpop.f32.mrf.mxu0
        %v1988 = vadd.f32 %v1878, %v1987
        %1989 = vmatmul.f32.gmra.mxu0 %v1859
        %v1990 = vpop.f32.mrf.mxu0
        %v1991 = vadd.f32 %v1878, %v1990
        %1992 = vdwg.mxu0
        %1993 = vst [vmem:[%s277] sm:$0xff] %v1898
        %1994 = vst [vmem:[%s277 + $0x8] sm:$0xff] %v1901
        %1995 = vst [vmem:[%s277 + $0x10] sm:$0xff] %v1904
        %1996 = vst [vmem:[%s277 + $0x18] sm:$0xff] %v1907
        %1997 = vst [vmem:[%s277 + $0x20] sm:$0xff] %v1910
        %1998 = vst [vmem:[%s277 + $0x28] sm:$0xff] %v1913
        %1999 = vst [vmem:[%s277 + $0x30] sm:$0xff] %v1916
        %2000 = vst [vmem:[%s277 + $0x38] sm:$0xff] %v1919
        %2001 = vst [vmem:[%s277 + $0x40] sm:$0xff] %v1922
        %2002 = vst [vmem:[%s277 + $0x48] sm:$0xff] %v1925
        %2003 = vst [vmem:[%s277 + $0x50] sm:$0xff] %v1928
        %2004 = vst [vmem:[%s277 + $0x58] sm:$0xff] %v1931
        %2005 = vst [vmem:[%s277 + $0x60] sm:$0xff] %v1934
        %2006 = vst [vmem:[%s277 + $0x68] sm:$0xff] %v1937
        %2007 = vst [vmem:[%s277 + $0x70] sm:$0xff] %v1940
        %2008 = vst [vmem:[%s277 + $0x78] sm:$0xff] %v1943
        %2009 = vst [vmem:[%s277 + $0x80] sm:$0xff] %v1946
        %2010 = vst [vmem:[%s277 + $0x88] sm:$0xff] %v1949
        %2011 = vst [vmem:[%s277 + $0x90] sm:$0xff] %v1952
        %2012 = vst [vmem:[%s277 + $0x98] sm:$0xff] %v1955
        %2013 = vst [vmem:[%s277 + $0xa0] sm:$0xff] %v1958
        %2014 = vst [vmem:[%s277 + $0xa8] sm:$0xff] %v1961
        %2015 = vst [vmem:[%s277 + $0xb0] sm:$0xff] %v1964
        %2016 = vst [vmem:[%s277 + $0xb8] sm:$0xff] %v1967
        %2017 = vst [vmem:[%s277 + $0xc0] sm:$0xff] %v1970
        %2018 = vst [vmem:[%s277 + $0xc8] sm:$0xff] %v1973
        %2019 = vst [vmem:[%s277 + $0xd0] sm:$0xff] %v1976
        %2020 = vst [vmem:[%s277 + $0xd8] sm:$0xff] %v1979
        %2021 = vst [vmem:[%s277 + $0xe0] sm:$0xff] %v1982
        %2022 = vst [vmem:[%s277 + $0xe8] sm:$0xff] %v1985
        %2023 = vst [vmem:[%s277 + $0xf0] sm:$0xff] %v1988
        %2024 = vst [vmem:[%s277 + $0xf8] sm:$0xff] %v1991
        %s2025 = sand.u32 %s141, 1
        %s2026 = scalar_lea.sflag [#allocation4], %s2025
        %s2027 = sand.u32 %s141, 1
        %s2028 = smul.addr %s2027, 256
        %s2029 = scalar_lea.vmem [#allocation8], %s2028
        // Predicated region
        $region53: #{tpu_custom_call.1} parent=39 // pred_check
          %p2030 = pneg %p151
        $region54: #{tpu_custom_call.1} parent=39 // pred_check_branch
          %2032 = sbr.rel (%p2030) target = $region56
        $region55: #{tpu_custom_call.1} parent=39 // pred_region
          %s2033 = smul.u32 32, %s23
          %2035 = vsyncadd %s2026, 0
          %s2036 = smul.addr %s2033, 8
          %s2037 = scalar_lea.hbm %s5, %s2036
          %s2038 = sshll.u32 %s2029, 4
          %s2039 = int_to_ptr.vmem [resolvable:$true] %s2038
          %s2040 = sshll.u32 %s2037, 4
          %s2041 = int_to_ptr.hbm [resolvable:$true] %s2040
          %2046 = dma.vmem_to_hbm [thread:$0]  %s2039, 4096, %s2041, %s2026, 128, 128, 8
        $region56: #{tpu_custom_call.1} parent=39 // pred_fallthru
          _
      $region40: #{tpu_custom_call.1} parent=5 // pred_fallthru
        _
      %p2047 = scmp.le.s32.totalorder 2, %s18
      // Predicated region
      $region57: #{tpu_custom_call.1} parent=5 // pred_check
        %p2048 = pneg %p2047
      $region58: #{tpu_custom_call.1} parent=5 // pred_check_branch
        %2050 = sbr.rel (%p2048) target = $region60
      $region59: #{tpu_custom_call.1} parent=5 // pred_region
        %s2051 = ssub.s32 %s18, 2
        // Predicated region
        $region61: #{tpu_custom_call.1} parent=59 // pred_check
          %p2052 = pneg %p157
        $region62: #{tpu_custom_call.1} parent=59 // pred_check_branch
          %2054 = sbr.rel (%p2052) target = $region64
        $region63: #{tpu_custom_call.1} parent=59 // pred_region
          %s2055 = sand.u32 %s142, 1
          %s2056 = scalar_lea.sflag [#allocation4], %s2055
          %s2057 = sand.u32 %s142, 1
          %s2058 = smul.addr %s2057, 256
          %s2059 = scalar_lea.vmem [#allocation8], %s2058
          %2061 = dma.done %s2056, 4096
        $region64: #{tpu_custom_call.1} parent=59 // pred_fallthru
          _
      $region60: #{tpu_custom_call.1} parent=5 // pred_fallthru
        _
    $region6: #{tpu_custom_call.1} parent=1 // loop_footer
      %s22 = sadd.s32 1, %s18
    $region7: #{tpu_custom_call.1} parent=1 // loop_footer_branch
      %17 = sbr.rel target = $region3
    $region8: #{tpu_custom_call.1} parent=1 // loop_exit
      _
    %2062 = vsyncpa [#allocation3], 1
    %s2063 = scalar_lea.sflag [#allocation3], 1
    %2064 = vsyncpa %s2063, 1
    %2065 = vsyncpa [#allocation6], 1
    %2066 = vsyncpa [#allocation4], 1
    %s2067 = scalar_lea.sflag [#allocation4], 1
    %2068 = vsyncpa %s2067, 1

</llo_original>
